<compile_context>
chip_gen: v7x
topology: tpu7x:2x2x1
jax: 0.10.0
libtpu: 0.0.40
codegen_flags: <defaults>
</compile_context>

<pallas_src>
import functools

import jax
import jax.numpy as jnp
from jax.experimental import pallas as pl
from jax.experimental.pallas import tpu as pltpu

# Logical (PyTorch) dims; hidden/output dims padded to 128-aligned lane widths.
D_IN = 784                 # fed unpadded (== full array dim in the BlockSpec)
H1,    H1_P    = 526, 640  # 5 * 128
H2,    H2_P    = 126, 128
D_OUT, D_OUT_P = 10,  128


def _round_up(x, m):
    return ((x + m - 1) // m) * m


def _cdiv(a, b):
    return -(-a // b)


def mlp_kernel(x_ref, w1_ref, b1_ref, w2_ref, b2_ref, w3_ref, b3_ref, o_ref):
    # x tile: (TM, 784) f32 -> cast to bf16 in-kernel (MXU native input format).
    x = x_ref[...].astype(jnp.bfloat16)
    # Layer 1: bf16 MXU matmul, f32 accumulate; bias + ReLU epilogue in f32 (v5e has no bf16 VPU).
    h1 = jnp.dot(x, w1_ref[...], preferred_element_type=jnp.float32)
    h1 = jnp.maximum(h1 + b1_ref[...], 0.0)
    # Layer 2
    h2 = jnp.dot(h1.astype(jnp.bfloat16), w2_ref[...],
                 preferred_element_type=jnp.float32)
    h2 = jnp.maximum(h2 + b2_ref[...], 0.0)
    # Layer 3 (logits, padded to 128 lanes -> unmasked lane-dense stores)
    out = jnp.dot(h2.astype(jnp.bfloat16), w3_ref[...],
                  preferred_element_type=jnp.float32)
    o_ref[...] = (out + b3_ref[...]).astype(o_ref.dtype)


def _choose_tiling(B, tm):
    """Balanced batch tiles: padding is at most ~8*n_tiles rows, never ~TM rows."""
    n_tiles = max(1, _cdiv(B, tm))
    if B > 256 and n_tiles < 2:
        n_tiles = 2  # v7x: >= 2 parallel tiles so both TensorCores get work
    TM = _round_up(_cdiv(B, n_tiles), 8)   # sublane-aligned
    Bp = TM * n_tiles
    return TM, n_tiles, Bp


@functools.partial(jax.jit, static_argnames=("tm",))
def mymodel_forward(x_nchw, packed_params, tm=512):
    """x_nchw: (B, 1, 28, 28) f32 -> logits (B, 10) f32."""
    w1, b1, w2, b2, w3, b3 = packed_params
    B = x_nchw.shape[0]

    TM, n_tiles, Bp = _choose_tiling(B, tm)

    # nn.Flatten(); keep f32 and unpadded on the feature axis (cast/pad handled in-kernel /
    # by Mosaic's physical tiling). Only pad the batch by a few rows when needed.
    x = x_nchw.reshape(B, D_IN)
    if Bp > B:
        x = jnp.pad(x, ((0, Bp - B), (0, 0)))

    flops = 2 * Bp * (D_IN * H1_P + H1_P * H2_P + H2_P * D_OUT_P)
    bytes_accessed = (
        x.size * x.dtype.itemsize
        + sum(a.size * a.dtype.itemsize for a in (w1, b1, w2, b2, w3, b3))
        + Bp * D_OUT_P * 4
    )

    out_padded = pl.pallas_call(
        mlp_kernel,
        out_shape=jax.ShapeDtypeStruct((Bp, D_OUT_P), jnp.float32),
        grid_spec=pltpu.PrefetchScalarGridSpec(
            num_scalar_prefetch=0,
            grid=(n_tiles,),
            in_specs=[
                pl.BlockSpec((TM, D_IN),      lambda i: (i, 0)),  # x tile (f32, full 784 lanes)
                pl.BlockSpec((D_IN, H1_P),    lambda i: (0, 0)),  # w1 (resident)
                pl.BlockSpec((1, H1_P),       lambda i: (0, 0)),  # b1
                pl.BlockSpec((H1_P, H2_P),    lambda i: (0, 0)),  # w2
                pl.BlockSpec((1, H2_P),       lambda i: (0, 0)),  # b2
                pl.BlockSpec((H2_P, D_OUT_P), lambda i: (0, 0)),  # w3
                pl.BlockSpec((1, D_OUT_P),    lambda i: (0, 0)),  # b3
            ],
            out_specs=pl.BlockSpec((TM, D_OUT_P), lambda i: (i, 0)),
        ),
        compiler_params=pltpu.CompilerParams(
            dimension_semantics=("parallel",),
            vmem_limit_bytes=32 * 1024 * 1024,
        ),
        cost_estimate=pl.CostEstimate(
            flops=flops, transcendentals=0, bytes_accessed=bytes_accessed),
    )(x, w1, b1, w2, b2, w3, b3)

    return out_padded[:B, :D_OUT]


def init_params(key):
    """Canonical f32 params matching nn.Linear, stored (in_features, out_features)."""
    k1, k2, k3, k4, k5, k6 = jax.random.split(key, 6)

    def linear(kw, kb, fan_in, fan_out):
        bound = 1.0 / jnp.sqrt(fan_in)
        w = jax.random.uniform(kw, (fan_in, fan_out), jnp.float32, -bound, bound)
        b = jax.random.uniform(kb, (1, fan_out), jnp.float32, -bound, bound)
        return w, b

    w1, b1 = linear(k1, k2, D_IN, H1)
    w2, b2 = linear(k3, k4, H1, H2)
    w3, b3 = linear(k5, k6, H2, D_OUT)
    return (w1, b1, w2, b2, w3, b3)


def pack_params(params):
    """One-time: zero-pad hidden/output feature dims to 128-aligned sizes, cast weights to bf16.
    Biases stay f32 (f32 epilogue on all chips). w1 keeps its 784 input rows (no lane pad)."""
    w1, b1, w2, b2, w3, b3 = params

    def pad2(a, rows, cols):
        return jnp.pad(a, ((0, rows - a.shape[0]), (0, cols - a.shape[1])))

    return (
        pad2(w1, D_IN, H1_P).astype(jnp.bfloat16),
        pad2(b1, 1, H1_P),
        pad2(w2, H1_P, H2_P).astype(jnp.bfloat16),
        pad2(b2, 1, H2_P),
        pad2(w3, H2_P, D_OUT_P).astype(jnp.bfloat16),
        pad2(b3, 1, D_OUT_P),
    )


def reference_forward(x_nchw, params):
    """Pure-JAX reference mirroring the kernel's bf16-input / f32-accumulate numerics."""
    w1, b1, w2, b2, w3, b3 = params
    x = x_nchw.reshape(x_nchw.shape[0], D_IN)
    q = lambda a: a.astype(jnp.bfloat16).astype(jnp.float32)
    dot = lambda a, b: jnp.dot(a, b, precision=jax.lax.Precision.HIGHEST)
    h1 = jnp.maximum(dot(q(x), q(w1)) + b1, 0.0)
    h2 = jnp.maximum(dot(q(h1), q(w2)) + b2, 0.0)
    return dot(q(h2), q(w3)) + b3


if __name__ == "__main__":
    key = jax.random.PRNGKey(0)
    kx, kp = jax.random.split(key)

    B = 8
    x = jax.random.normal(kx, (B, 1, 28, 28), dtype=jnp.float32)  # MNIST-shaped NCHW input
    params = init_params(kp)
    packed = pack_params(params)

    out = mymodel_forward(x, packed)
    out = jax.block_until_ready(out)

    ref = reference_forward(x, params)
    assert out.shape == (B, D_OUT), out.shape
    max_diff = float(jnp.max(jnp.abs(out - ref)))
    assert max_diff < 2e-2, f"mismatch vs reference, max abs diff {max_diff}"

    print("KERNEL_OK")
</pallas_src>

<mosaic_0001>
module attributes {stable_mosaic.version = 11 : i64} {
  func.func @mlp_kernel(%arg0: i32, %arg1: memref<8x784xf32, #tpu.memory_space<vmem>>, %arg2: memref<784x640xbf16, #tpu.memory_space<vmem>>, %arg3: memref<1x640xf32, #tpu.memory_space<vmem>>, %arg4: memref<640x128xbf16, #tpu.memory_space<vmem>>, %arg5: memref<1x128xf32, #tpu.memory_space<vmem>>, %arg6: memref<128x128xbf16, #tpu.memory_space<vmem>>, %arg7: memref<1x128xf32, #tpu.memory_space<vmem>>, %arg8: memref<8x128xf32, #tpu.memory_space<vmem>>) attributes {dimension_semantics = [#tpu.dimension_semantics<parallel>], iteration_bounds = array<i64: 1>, scalar_prefetch = 0 : i64, scratch_operands = 0 : i64, tpu.core_type = #tpu.core_type<tc>, window_params = [{transform_indices = @transform_0, window_bounds = array<i64: 8, 784>}, {pipeline_mode = #tpu.pipeline_mode<synchronous>, transform_indices = @transform_1, window_bounds = array<i64: 784, 640>}, {pipeline_mode = #tpu.pipeline_mode<synchronous>, transform_indices = @transform_2, window_bounds = array<i64: 1, 640>}, {pipeline_mode = #tpu.pipeline_mode<synchronous>, transform_indices = @transform_3, window_bounds = array<i64: 640, 128>}, {pipeline_mode = #tpu.pipeline_mode<synchronous>, transform_indices = @transform_4, window_bounds = array<i64: 1, 128>}, {pipeline_mode = #tpu.pipeline_mode<synchronous>, transform_indices = @transform_5, window_bounds = array<i64: 128, 128>}, {pipeline_mode = #tpu.pipeline_mode<synchronous>, transform_indices = @transform_6, window_bounds = array<i64: 1, 128>}, {transform_indices = @transform_7, window_bounds = array<i64: 8, 128>}]} {
    %c0 = arith.constant 0 : index
    %c0_0 = arith.constant 0 : index
    %0 = vector.load %arg1[%c0, %c0_0] : memref<8x784xf32, #tpu.memory_space<vmem>>, vector<8x784xf32>
    %1 = arith.truncf %0 : vector<8x784xf32> to vector<8x784xbf16>
    %c0_1 = arith.constant 0 : index
    %c0_2 = arith.constant 0 : index
    %2 = vector.load %arg2[%c0_1, %c0_2] : memref<784x640xbf16, #tpu.memory_space<vmem>>, vector<784x640xbf16>
    %cst = arith.constant dense<0.000000e+00> : vector<8x640xf32>
    %3 = tpu.matmul %1, %2, %cst {dimension_numbers = #tpu.dot_dimension_numbers<[1], [0], [0], [1], [0, 0, 1, 1], [], []>} : vector<8x784xbf16>, vector<784x640xbf16>, vector<8x640xf32> -> vector<8x640xf32>
    %c0_3 = arith.constant 0 : index
    %c0_4 = arith.constant 0 : index
    %4 = vector.load %arg3[%c0_3, %c0_4] : memref<1x640xf32, #tpu.memory_space<vmem>>, vector<1x640xf32>
    %5 = vector.broadcast %4 : vector<1x640xf32> to vector<8x640xf32>
    %6 = arith.addf %3, %5 : vector<8x640xf32>
    %cst_5 = arith.constant 0.000000e+00 : f32
    %7 = vector.broadcast %cst_5 : f32 to vector<8x640xf32>
    %8 = arith.maximumf %6, %7 : vector<8x640xf32>
    %9 = arith.truncf %8 : vector<8x640xf32> to vector<8x640xbf16>
    %c0_6 = arith.constant 0 : index
    %c0_7 = arith.constant 0 : index
    %10 = vector.load %arg4[%c0_6, %c0_7] : memref<640x128xbf16, #tpu.memory_space<vmem>>, vector<640x128xbf16>
    %cst_8 = arith.constant dense<0.000000e+00> : vector<8x128xf32>
    %11 = tpu.matmul %9, %10, %cst_8 {dimension_numbers = #tpu.dot_dimension_numbers<[1], [0], [0], [1], [0, 0, 1, 1], [], []>} : vector<8x640xbf16>, vector<640x128xbf16>, vector<8x128xf32> -> vector<8x128xf32>
    %c0_9 = arith.constant 0 : index
    %c0_10 = arith.constant 0 : index
    %12 = vector.load %arg5[%c0_9, %c0_10] : memref<1x128xf32, #tpu.memory_space<vmem>>, vector<1x128xf32>
    %13 = vector.broadcast %12 : vector<1x128xf32> to vector<8x128xf32>
    %14 = arith.addf %11, %13 : vector<8x128xf32>
    %cst_11 = arith.constant 0.000000e+00 : f32
    %15 = vector.broadcast %cst_11 : f32 to vector<8x128xf32>
    %16 = arith.maximumf %14, %15 : vector<8x128xf32>
    %17 = arith.truncf %16 : vector<8x128xf32> to vector<8x128xbf16>
    %c0_12 = arith.constant 0 : index
    %c0_13 = arith.constant 0 : index
    %18 = vector.load %arg6[%c0_12, %c0_13] : memref<128x128xbf16, #tpu.memory_space<vmem>>, vector<128x128xbf16>
    %cst_14 = arith.constant dense<0.000000e+00> : vector<8x128xf32>
    %19 = tpu.matmul %17, %18, %cst_14 {dimension_numbers = #tpu.dot_dimension_numbers<[1], [0], [0], [1], [0, 0, 1, 1], [], []>} : vector<8x128xbf16>, vector<128x128xbf16>, vector<8x128xf32> -> vector<8x128xf32>
    %c0_15 = arith.constant 0 : index
    %c0_16 = arith.constant 0 : index
    %20 = vector.load %arg7[%c0_15, %c0_16] : memref<1x128xf32, #tpu.memory_space<vmem>>, vector<1x128xf32>
    %21 = vector.broadcast %20 : vector<1x128xf32> to vector<8x128xf32>
    %22 = arith.addf %19, %21 : vector<8x128xf32>
    %c0_17 = arith.constant 0 : index
    %c0_18 = arith.constant 0 : index
    %23 = vector.load %arg8[%c0_17, %c0_18] : memref<8x128xf32, #tpu.memory_space<vmem>>, vector<8x128xf32>
    tpu.vector_store %arg8[%c0_17, %c0_18], %22 {strides = array<i32>} : memref<8x128xf32, #tpu.memory_space<vmem>>, vector<8x128xf32>,
    return
  }
  func.func @transform_0(%arg0: i32) -> (i32, i32) {
    %c0_i32 = arith.constant 0 : i32
    %c0_i32_0 = arith.constant 0 : i32
    return %arg0, %c0_i32 : i32, i32
  }
  func.func @transform_1(%arg0: i32) -> (i32, i32) {
    %c0_i32 = arith.constant 0 : i32
    %c0_i32_0 = arith.constant 0 : i32
    %c0_i32_1 = arith.constant 0 : i32
    return %c0_i32, %c0_i32_0 : i32, i32
  }
  func.func @transform_2(%arg0: i32) -> (i32, i32) {
    %c0_i32 = arith.constant 0 : i32
    %c0_i32_0 = arith.constant 0 : i32
    %c0_i32_1 = arith.constant 0 : i32
    return %c0_i32, %c0_i32_0 : i32, i32
  }
  func.func @transform_3(%arg0: i32) -> (i32, i32) {
    %c0_i32 = arith.constant 0 : i32
    %c0_i32_0 = arith.constant 0 : i32
    %c0_i32_1 = arith.constant 0 : i32
    return %c0_i32, %c0_i32_0 : i32, i32
  }
  func.func @transform_4(%arg0: i32) -> (i32, i32) {
    %c0_i32 = arith.constant 0 : i32
    %c0_i32_0 = arith.constant 0 : i32
    %c0_i32_1 = arith.constant 0 : i32
    return %c0_i32, %c0_i32_0 : i32, i32
  }
  func.func @transform_5(%arg0: i32) -> (i32, i32) {
    %c0_i32 = arith.constant 0 : i32
    %c0_i32_0 = arith.constant 0 : i32
    %c0_i32_1 = arith.constant 0 : i32
    return %c0_i32, %c0_i32_0 : i32, i32
  }
  func.func @transform_6(%arg0: i32) -> (i32, i32) {
    %c0_i32 = arith.constant 0 : i32
    %c0_i32_0 = arith.constant 0 : i32
    %c0_i32_1 = arith.constant 0 : i32
    return %c0_i32, %c0_i32_0 : i32, i32
  }
  func.func @transform_7(%arg0: i32) -> (i32, i32) {
    %c0_i32 = arith.constant 0 : i32
    %c0_i32_0 = arith.constant 0 : i32
    return %arg0, %c0_i32 : i32, i32
  }
}

</mosaic_0001>

<llo_original>
// kernel: mymodel_forward.1
$region0: #{mymodel_forward.1}
  #allocation0 [shape = 'u32[]', space=smem, size = 0x4, offset = 0x4, fixed_abs, tag = 'smem constant byte address 0x4 - core index']
  #allocation1 [shape = 'u32[144,128]{1,0:T(1,128)}', space=vmem, size = 0x12000, scoped, tag = 'internal scratch']
  %s0 = inlined_call_operand.vmem [shape: f32[8,784], index: 0, kind: input, shape index: {}]
  %s1 = inlined_call_operand.hbm [shape: bf16[784,640], index: 1, kind: input, shape index: {}]
  %s2 = inlined_call_operand.vmem [shape: f32[1,640], index: 2, kind: input, shape index: {}]
  %s3 = inlined_call_operand.vmem [shape: bf16[640,128], index: 3, kind: input, shape index: {}]
  %s4 = inlined_call_operand.vmem [shape: f32[1,128], index: 4, kind: input, shape index: {}]
  %s5 = inlined_call_operand.vmem [shape: bf16[128,128], index: 5, kind: input, shape index: {}]
  %s6 = inlined_call_operand.vmem [shape: f32[1,128], index: 6, kind: input, shape index: {}]
  %s7 = inlined_call_operand.hbm [shape: f32[8,128], index: 7, kind: output, shape index: {}]
  %s8 = sld [smem:[#allocation0]]
  $region42: #{mymodel_forward.1} parent=0
    _
  %s10 = ssub.s32 1, %s8
  %s11 = scalar_select 0, %s10, %s8
  $region1: #{mymodel_forward.1} parent=0
    #allocation2 [shape = 'u8[1003520]{0}', space=vmem, size = 0xf5000, scoped, tag = 'input window, operand 1, single buffered']
    #allocation3 [shape = 's32[1]{0}', space=sflag, size = 0x4, scoped, tag = 'scoped memory for mymodel_forward.1']
    #allocation4 [shape = 's32[1]{0}', space=sflag, size = 0x4, scoped, tag = 'scoped memory for mymodel_forward.1']
    #allocation5 [shape = 'u8[4096]{0}', space=vmem, size = 0x1000, scoped, tag = 'output window, operand 0, single buffered']
    %12 = vsyncpa [#allocation3], 0
    %13 = vsyncpa [#allocation4], 0
    // Predicated region
    $region2: #{mymodel_forward.1} parent=1 // pred_check
      _
    $region3: #{mymodel_forward.1} parent=1 // pred_check_branch
      %15 = sbr.rel (0) target = $region5
    $region4: #{mymodel_forward.1} parent=1 // pred_region
      _
    $region5: #{mymodel_forward.1} parent=1 // pred_fallthru
      _
    // Predicated region
    $region6: #{mymodel_forward.1} parent=1 // pred_check
      _
    $region7: #{mymodel_forward.1} parent=1 // pred_check_branch
      %17 = sbr.rel (0) target = $region9
    $region8: #{mymodel_forward.1} parent=1 // pred_region
      %s19 = ssub.s32 31360, 31360
      %20 = vsyncadd [#allocation3], %s19
      %s21 = sshll.u32 [#allocation2], 4
      %s22 = int_to_ptr.vmem [resolvable:$true] %s21
      %27 = dma.hbm_to_vmem [thread:$0]  %s1, 31360, %s22, [#allocation3], 320, 320, 20
    $region9: #{mymodel_forward.1} parent=1 // pred_fallthru
      _
    // Predicated region
    $region10: #{mymodel_forward.1} parent=1 // pred_check
      _
    $region11: #{mymodel_forward.1} parent=1 // pred_check_branch
      %29 = sbr.rel (0) target = $region13
    $region12: #{mymodel_forward.1} parent=1 // pred_region
      _
    $region13: #{mymodel_forward.1} parent=1 // pred_fallthru
      _
    // Predicated region
    $region14: #{mymodel_forward.1} parent=1 // pred_check
      _
    $region15: #{mymodel_forward.1} parent=1 // pred_check_branch
      %31 = sbr.rel (0) target = $region17
    $region16: #{mymodel_forward.1} parent=1 // pred_region
      _
    $region17: #{mymodel_forward.1} parent=1 // pred_fallthru
      _
    // Predicated region
    $region18: #{mymodel_forward.1} parent=1 // pred_check
      _
    $region19: #{mymodel_forward.1} parent=1 // pred_check_branch
      %33 = sbr.rel (0) target = $region21
    $region20: #{mymodel_forward.1} parent=1 // pred_region
      _
    $region21: #{mymodel_forward.1} parent=1 // pred_fallthru
      _
    // Predicated region
    $region22: #{mymodel_forward.1} parent=1 // pred_check
      _
    $region23: #{mymodel_forward.1} parent=1 // pred_check_branch
      %35 = sbr.rel (0) target = $region25
    $region24: #{mymodel_forward.1} parent=1 // pred_region
      _
    $region25: #{mymodel_forward.1} parent=1 // pred_fallthru
      _
    // Predicated region
    $region26: #{mymodel_forward.1} parent=1 // pred_check
      _
    $region27: #{mymodel_forward.1} parent=1 // pred_check_branch
      %37 = sbr.rel (0) target = $region29
    $region28: #{mymodel_forward.1} parent=1 // pred_region
      _
    $region29: #{mymodel_forward.1} parent=1 // pred_fallthru
      _
    // Predicated region
    $region30: #{mymodel_forward.1} parent=1 // pred_check
      _
    $region31: #{mymodel_forward.1} parent=1 // pred_check_branch
      %39 = sbr.rel (0) target = $region33
    $region32: #{mymodel_forward.1} parent=1 // pred_region
      %40 = dma.done [#allocation3], 31360
    $region33: #{mymodel_forward.1} parent=1 // pred_fallthru
      _
    %v42 = vld [vmem:[%s0] sm:$0xff]
    %v43 = vld [vmem:[%s0 + $0x8] sm:$0xff]
    %v44 = vld [vmem:[%s0 + $0x10] sm:$0xff]
    %v45 = vld [vmem:[%s0 + $0x18] sm:$0xff]
    %v46 = vld [vmem:[%s0 + $0x20] sm:$0xff]
    %v47 = vld [vmem:[%s0 + $0x28] sm:$0xff]
    %v48 = vld [vmem:[%s0 + $0x30] sm:$0xff]
    %v49 = vpack.c.bf16 %v42, %v42
    %v50 = vpack.c.bf16 %v43, %v43
    %v51 = vpack.c.bf16 %v44, %v44
    %v52 = vpack.c.bf16 %v45, %v45
    %v53 = vpack.c.bf16 %v46, %v46
    %v54 = vpack.c.bf16 %v47, %v47
    %v55 = vpack.c.bf16 %v48, %v48
    %v56 = vld [vmem:[#allocation2] sm:$0xff]
    %v57 = vld [vmem:[#allocation2 + $0x8] sm:$0xff]
    %v58 = vld [vmem:[#allocation2 + $0x10] sm:$0xf]
    %v59 = vld [vmem:[#allocation2 + $0x14] sm:$0xff]
    %v60 = vld [vmem:[#allocation2 + $0x1c] sm:$0xff]
    %v61 = vld [vmem:[#allocation2 + $0x24] sm:$0xf]
    %v62 = vld [vmem:[#allocation2 + $0x28] sm:$0xff]
    %v63 = vld [vmem:[#allocation2 + $0x30] sm:$0xff]
    %v64 = vld [vmem:[#allocation2 + $0x38] sm:$0xf]
    %v65 = vld [vmem:[#allocation2 + $0x3c] sm:$0xff]
    %v66 = vld [vmem:[#allocation2 + $0x44] sm:$0xff]
    %v67 = vld [vmem:[#allocation2 + $0x4c] sm:$0xf]
    %v68 = vld [vmem:[#allocation2 + $0x50] sm:$0xff]
    %v69 = vld [vmem:[#allocation2 + $0x58] sm:$0xff]
    %v70 = vld [vmem:[#allocation2 + $0x60] sm:$0xf]
    %v71 = vld [vmem:[#allocation2 + $0x64] sm:$0xff]
    %v72 = vld [vmem:[#allocation2 + $0x6c] sm:$0xff]
    %v73 = vld [vmem:[#allocation2 + $0x74] sm:$0xf]
    %v74 = vld [vmem:[#allocation2 + $0x78] sm:$0xff]
    %v75 = vld [vmem:[#allocation2 + $0x80] sm:$0xff]
    %v76 = vld [vmem:[#allocation2 + $0x88] sm:$0xf]
    %v77 = vld [vmem:[#allocation2 + $0x8c] sm:$0xff]
    %v78 = vld [vmem:[#allocation2 + $0x94] sm:$0xff]
    %v79 = vld [vmem:[#allocation2 + $0x9c] sm:$0xf]
    %v80 = vld [vmem:[#allocation2 + $0xa0] sm:$0xff]
    %v81 = vld [vmem:[#allocation2 + $0xa8] sm:$0xff]
    %v82 = vld [vmem:[#allocation2 + $0xb0] sm:$0xf]
    %v83 = vld [vmem:[#allocation2 + $0xb4] sm:$0xff]
    %v84 = vld [vmem:[#allocation2 + $0xbc] sm:$0xff]
    %v85 = vld [vmem:[#allocation2 + $0xc4] sm:$0xf]
    %v86 = vld [vmem:[#allocation2 + $0xc8] sm:$0xff]
    %v87 = vld [vmem:[#allocation2 + $0xd0] sm:$0xff]
    %v88 = vld [vmem:[#allocation2 + $0xd8] sm:$0xf]
    %v89 = vld [vmem:[#allocation2 + $0xdc] sm:$0xff]
    %v90 = vld [vmem:[#allocation2 + $0xe4] sm:$0xff]
    %v91 = vld [vmem:[#allocation2 + $0xec] sm:$0xf]
    %v92 = vld [vmem:[#allocation2 + $0xf0] sm:$0xff]
    %v93 = vld [vmem:[#allocation2 + $0xf8] sm:$0xff]
    %v94 = vld [vmem:[#allocation2 + $0x100] sm:$0xf]
    %v95 = vld [vmem:[#allocation2 + $0x104] sm:$0xff]
    %v96 = vld [vmem:[#allocation2 + $0x10c] sm:$0xff]
    %v97 = vld [vmem:[#allocation2 + $0x114] sm:$0xf]
    %v98 = vld [vmem:[#allocation2 + $0x118] sm:$0xff]
    %v99 = vld [vmem:[#allocation2 + $0x120] sm:$0xff]
    %v100 = vld [vmem:[#allocation2 + $0x128] sm:$0xf]
    %v101 = vld [vmem:[#allocation2 + $0x12c] sm:$0xff]
    %v102 = vld [vmem:[#allocation2 + $0x134] sm:$0xff]
    %v103 = vld [vmem:[#allocation2 + $0x13c] sm:$0xf]
    %v104 = vld [vmem:[#allocation2 + $0x140] sm:$0xff]
    %v105 = vld [vmem:[#allocation2 + $0x148] sm:$0xff]
    %v106 = vld [vmem:[#allocation2 + $0x150] sm:$0xf]
    %v107 = vld [vmem:[#allocation2 + $0x154] sm:$0xff]
    %v108 = vld [vmem:[#allocation2 + $0x15c] sm:$0xff]
    %v109 = vld [vmem:[#allocation2 + $0x164] sm:$0xf]
    %v110 = vld [vmem:[#allocation2 + $0x168] sm:$0xff]
    %v111 = vld [vmem:[#allocation2 + $0x170] sm:$0xff]
    %v112 = vld [vmem:[#allocation2 + $0x178] sm:$0xf]
    %v113 = vld [vmem:[#allocation2 + $0x17c] sm:$0xff]
    %v114 = vld [vmem:[#allocation2 + $0x184] sm:$0xff]
    %v115 = vld [vmem:[#allocation2 + $0x18c] sm:$0xf]
    %v116 = vld [vmem:[#allocation2 + $0x190] sm:$0xff]
    %v117 = vld [vmem:[#allocation2 + $0x198] sm:$0xff]
    %v118 = vld [vmem:[#allocation2 + $0x1a0] sm:$0xf]
    %v119 = vld [vmem:[#allocation2 + $0x1a4] sm:$0xff]
    %v120 = vld [vmem:[#allocation2 + $0x1ac] sm:$0xff]
    %v121 = vld [vmem:[#allocation2 + $0x1b4] sm:$0xf]
    %v122 = vld [vmem:[#allocation2 + $0x1b8] sm:$0xff]
    %v123 = vld [vmem:[#allocation2 + $0x1c0] sm:$0xff]
    %v124 = vld [vmem:[#allocation2 + $0x1c8] sm:$0xf]
    %v125 = vld [vmem:[#allocation2 + $0x1cc] sm:$0xff]
    %v126 = vld [vmem:[#allocation2 + $0x1d4] sm:$0xff]
    %v127 = vld [vmem:[#allocation2 + $0x1dc] sm:$0xf]
    %v128 = vld [vmem:[#allocation2 + $0x1e0] sm:$0xff]
    %v129 = vld [vmem:[#allocation2 + $0x1e8] sm:$0xff]
    %v130 = vld [vmem:[#allocation2 + $0x1f0] sm:$0xf]
    %v131 = vld [vmem:[#allocation2 + $0x1f4] sm:$0xff]
    %v132 = vld [vmem:[#allocation2 + $0x1fc] sm:$0xff]
    %v133 = vld [vmem:[#allocation2 + $0x204] sm:$0xf]
    %v134 = vld [vmem:[#allocation2 + $0x208] sm:$0xff]
    %v135 = vld [vmem:[#allocation2 + $0x210] sm:$0xff]
    %v136 = vld [vmem:[#allocation2 + $0x218] sm:$0xf]
    %v137 = vld [vmem:[#allocation2 + $0x21c] sm:$0xff]
    %v138 = vld [vmem:[#allocation2 + $0x224] sm:$0xff]
    %v139 = vld [vmem:[#allocation2 + $0x22c] sm:$0xf]
    %v140 = vld [vmem:[#allocation2 + $0x230] sm:$0xff]
    %v141 = vld [vmem:[#allocation2 + $0x238] sm:$0xff]
    %v142 = vld [vmem:[#allocation2 + $0x240] sm:$0xf]
    %v143 = vld [vmem:[#allocation2 + $0x244] sm:$0xff]
    %v144 = vld [vmem:[#allocation2 + $0x24c] sm:$0xff]
    %v145 = vld [vmem:[#allocation2 + $0x254] sm:$0xf]
    %v146 = vld [vmem:[#allocation2 + $0x258] sm:$0xff]
    %v147 = vld [vmem:[#allocation2 + $0x260] sm:$0xff]
    %v148 = vld [vmem:[#allocation2 + $0x268] sm:$0xf]
    %v149 = vld [vmem:[#allocation2 + $0x26c] sm:$0xff]
    %v150 = vld [vmem:[#allocation2 + $0x274] sm:$0xff]
    %v151 = vld [vmem:[#allocation2 + $0x27c] sm:$0xf]
    %v152 = vld [vmem:[#allocation2 + $0x280] sm:$0xff]
    %v153 = vld [vmem:[#allocation2 + $0x288] sm:$0xff]
    %v154 = vld [vmem:[#allocation2 + $0x290] sm:$0xf]
    %v155 = vld [vmem:[#allocation2 + $0x294] sm:$0xff]
    %v156 = vld [vmem:[#allocation2 + $0x29c] sm:$0xff]
    %v157 = vld [vmem:[#allocation2 + $0x2a4] sm:$0xf]
    %v158 = vld [vmem:[#allocation2 + $0x2a8] sm:$0xff]
    %v159 = vld [vmem:[#allocation2 + $0x2b0] sm:$0xff]
    %v160 = vld [vmem:[#allocation2 + $0x2b8] sm:$0xf]
    %v161 = vld [vmem:[#allocation2 + $0x2bc] sm:$0xff]
    %v162 = vld [vmem:[#allocation2 + $0x2c4] sm:$0xff]
    %v163 = vld [vmem:[#allocation2 + $0x2cc] sm:$0xf]
    %v164 = vld [vmem:[#allocation2 + $0x2d0] sm:$0xff]
    %v165 = vld [vmem:[#allocation2 + $0x2d8] sm:$0xff]
    %v166 = vld [vmem:[#allocation2 + $0x2e0] sm:$0xf]
    %v167 = vld [vmem:[#allocation2 + $0x2e4] sm:$0xff]
    %v168 = vld [vmem:[#allocation2 + $0x2ec] sm:$0xff]
    %v169 = vld [vmem:[#allocation2 + $0x2f4] sm:$0xf]
    %v170 = vld [vmem:[#allocation2 + $0x2f8] sm:$0xff]
    %v171 = vld [vmem:[#allocation2 + $0x300] sm:$0xff]
    %v172 = vld [vmem:[#allocation2 + $0x308] sm:$0xf]
    %v173 = vld [vmem:[#allocation2 + $0x30c] sm:$0xff]
    %v174 = vld [vmem:[#allocation2 + $0x314] sm:$0xff]
    %v175 = vld [vmem:[#allocation2 + $0x31c] sm:$0xf]
    %v176 = vld [vmem:[#allocation2 + $0x320] sm:$0xff]
    %v177 = vld [vmem:[#allocation2 + $0x328] sm:$0xff]
    %v178 = vld [vmem:[#allocation2 + $0x330] sm:$0xf]
    %v179 = vld [vmem:[#allocation2 + $0x334] sm:$0xff]
    %v180 = vld [vmem:[#allocation2 + $0x33c] sm:$0xff]
    %v181 = vld [vmem:[#allocation2 + $0x344] sm:$0xf]
    %v182 = vld [vmem:[#allocation2 + $0x348] sm:$0xff]
    %v183 = vld [vmem:[#allocation2 + $0x350] sm:$0xff]
    %v184 = vld [vmem:[#allocation2 + $0x358] sm:$0xf]
    %v185 = vld [vmem:[#allocation2 + $0x35c] sm:$0xff]
    %v186 = vld [vmem:[#allocation2 + $0x364] sm:$0xff]
    %v187 = vld [vmem:[#allocation2 + $0x36c] sm:$0xf]
    %v188 = vld [vmem:[#allocation2 + $0x370] sm:$0xff]
    %v189 = vld [vmem:[#allocation2 + $0x378] sm:$0xff]
    %v190 = vld [vmem:[#allocation2 + $0x380] sm:$0xf]
    %v191 = vld [vmem:[#allocation2 + $0x384] sm:$0xff]
    %v192 = vld [vmem:[#allocation2 + $0x38c] sm:$0xff]
    %v193 = vld [vmem:[#allocation2 + $0x394] sm:$0xf]
    %v194 = vld [vmem:[#allocation2 + $0x398] sm:$0xff]
    %v195 = vld [vmem:[#allocation2 + $0x3a0] sm:$0xff]
    %v196 = vld [vmem:[#allocation2 + $0x3a8] sm:$0xf]
    %v197 = vld [vmem:[#allocation2 + $0x3ac] sm:$0xff]
    %v198 = vld [vmem:[#allocation2 + $0x3b4] sm:$0xff]
    %v199 = vld [vmem:[#allocation2 + $0x3bc] sm:$0xf]
    %v200 = vld [vmem:[#allocation2 + $0x3c0] sm:$0xff]
    %v201 = vld [vmem:[#allocation2 + $0x3c8] sm:$0xff]
    %v202 = vld [vmem:[#allocation2 + $0x3d0] sm:$0xf]
    %v203 = vld [vmem:[#allocation2 + $0x3d4] sm:$0xff]
    %v204 = vld [vmem:[#allocation2 + $0x3dc] sm:$0xff]
    %v205 = vld [vmem:[#allocation2 + $0x3e4] sm:$0xf]
    %v206 = vld [vmem:[#allocation2 + $0x3e8] sm:$0xff]
    %v207 = vld [vmem:[#allocation2 + $0x3f0] sm:$0xff]
    %v208 = vld [vmem:[#allocation2 + $0x3f8] sm:$0xf]
    %v209 = vld [vmem:[#allocation2 + $0x3fc] sm:$0xff]
    %v210 = vld [vmem:[#allocation2 + $0x404] sm:$0xff]
    %v211 = vld [vmem:[#allocation2 + $0x40c] sm:$0xf]
    %v212 = vld [vmem:[#allocation2 + $0x410] sm:$0xff]
    %v213 = vld [vmem:[#allocation2 + $0x418] sm:$0xff]
    %v214 = vld [vmem:[#allocation2 + $0x420] sm:$0xf]
    %v215 = vld [vmem:[#allocation2 + $0x424] sm:$0xff]
    %v216 = vld [vmem:[#allocation2 + $0x42c] sm:$0xff]
    %v217 = vld [vmem:[#allocation2 + $0x434] sm:$0xf]
    %v218 = vld [vmem:[#allocation2 + $0x438] sm:$0xff]
    %v219 = vld [vmem:[#allocation2 + $0x440] sm:$0xff]
    %v220 = vld [vmem:[#allocation2 + $0x448] sm:$0xf]
    %v221 = vld [vmem:[#allocation2 + $0x44c] sm:$0xff]
    %v222 = vld [vmem:[#allocation2 + $0x454] sm:$0xff]
    %v223 = vld [vmem:[#allocation2 + $0x45c] sm:$0xf]
    %v224 = vld [vmem:[#allocation2 + $0x460] sm:$0xff]
    %v225 = vld [vmem:[#allocation2 + $0x468] sm:$0xff]
    %v226 = vld [vmem:[#allocation2 + $0x470] sm:$0xf]
    %v227 = vld [vmem:[#allocation2 + $0x474] sm:$0xff]
    %v228 = vld [vmem:[#allocation2 + $0x47c] sm:$0xff]
    %v229 = vld [vmem:[#allocation2 + $0x484] sm:$0xf]
    %v230 = vld [vmem:[#allocation2 + $0x488] sm:$0xff]
    %v231 = vld [vmem:[#allocation2 + $0x490] sm:$0xff]
    %v232 = vld [vmem:[#allocation2 + $0x498] sm:$0xf]
    %v233 = vld [vmem:[#allocation2 + $0x49c] sm:$0xff]
    %v234 = vld [vmem:[#allocation2 + $0x4a4] sm:$0xff]
    %v235 = vld [vmem:[#allocation2 + $0x4ac] sm:$0xf]
    %v236 = vld [vmem:[#allocation2 + $0x4b0] sm:$0xff]
    %v237 = vld [vmem:[#allocation2 + $0x4b8] sm:$0xff]
    %v238 = vld [vmem:[#allocation2 + $0x4c0] sm:$0xf]
    %v239 = vld [vmem:[#allocation2 + $0x4c4] sm:$0xff]
    %v240 = vld [vmem:[#allocation2 + $0x4cc] sm:$0xff]
    %v241 = vld [vmem:[#allocation2 + $0x4d4] sm:$0xf]
    %v242 = vld [vmem:[#allocation2 + $0x4d8] sm:$0xff]
    %v243 = vld [vmem:[#allocation2 + $0x4e0] sm:$0xff]
    %v244 = vld [vmem:[#allocation2 + $0x4e8] sm:$0xf]
    %v245 = vld [vmem:[#allocation2 + $0x4ec] sm:$0xff]
    %v246 = vld [vmem:[#allocation2 + $0x4f4] sm:$0xff]
    %v247 = vld [vmem:[#allocation2 + $0x4fc] sm:$0xf]
    %v248 = vld [vmem:[#allocation2 + $0x500] sm:$0xff]
    %v249 = vld [vmem:[#allocation2 + $0x508] sm:$0xff]
    %v250 = vld [vmem:[#allocation2 + $0x510] sm:$0xf]
    %v251 = vld [vmem:[#allocation2 + $0x514] sm:$0xff]
    %v252 = vld [vmem:[#allocation2 + $0x51c] sm:$0xff]
    %v253 = vld [vmem:[#allocation2 + $0x524] sm:$0xf]
    %v254 = vld [vmem:[#allocation2 + $0x528] sm:$0xff]
    %v255 = vld [vmem:[#allocation2 + $0x530] sm:$0xff]
    %v256 = vld [vmem:[#allocation2 + $0x538] sm:$0xf]
    %v257 = vld [vmem:[#allocation2 + $0x53c] sm:$0xff]
    %v258 = vld [vmem:[#allocation2 + $0x544] sm:$0xff]
    %v259 = vld [vmem:[#allocation2 + $0x54c] sm:$0xf]
    %v260 = vld [vmem:[#allocation2 + $0x550] sm:$0xff]
    %v261 = vld [vmem:[#allocation2 + $0x558] sm:$0xff]
    %v262 = vld [vmem:[#allocation2 + $0x560] sm:$0xf]
    %v263 = vld [vmem:[#allocation2 + $0x564] sm:$0xff]
    %v264 = vld [vmem:[#allocation2 + $0x56c] sm:$0xff]
    %v265 = vld [vmem:[#allocation2 + $0x574] sm:$0xf]
    %v266 = vld [vmem:[#allocation2 + $0x578] sm:$0xff]
    %v267 = vld [vmem:[#allocation2 + $0x580] sm:$0xff]
    %v268 = vld [vmem:[#allocation2 + $0x588] sm:$0xf]
    %v269 = vld [vmem:[#allocation2 + $0x58c] sm:$0xff]
    %v270 = vld [vmem:[#allocation2 + $0x594] sm:$0xff]
    %v271 = vld [vmem:[#allocation2 + $0x59c] sm:$0xf]
    %v272 = vld [vmem:[#allocation2 + $0x5a0] sm:$0xff]
    %v273 = vld [vmem:[#allocation2 + $0x5a8] sm:$0xff]
    %v274 = vld [vmem:[#allocation2 + $0x5b0] sm:$0xf]
    %v275 = vld [vmem:[#allocation2 + $0x5b4] sm:$0xff]
    %v276 = vld [vmem:[#allocation2 + $0x5bc] sm:$0xff]
    %v277 = vld [vmem:[#allocation2 + $0x5c4] sm:$0xf]
    %v278 = vld [vmem:[#allocation2 + $0x5c8] sm:$0xff]
    %v279 = vld [vmem:[#allocation2 + $0x5d0] sm:$0xff]
    %v280 = vld [vmem:[#allocation2 + $0x5d8] sm:$0xf]
    %v281 = vld [vmem:[#allocation2 + $0x5dc] sm:$0xff]
    %v282 = vld [vmem:[#allocation2 + $0x5e4] sm:$0xff]
    %v283 = vld [vmem:[#allocation2 + $0x5ec] sm:$0xf]
    %v284 = vld [vmem:[#allocation2 + $0x5f0] sm:$0xff]
    %v285 = vld [vmem:[#allocation2 + $0x5f8] sm:$0xff]
    %v286 = vld [vmem:[#allocation2 + $0x600] sm:$0xf]
    %v287 = vld [vmem:[#allocation2 + $0x604] sm:$0xff]
    %v288 = vld [vmem:[#allocation2 + $0x60c] sm:$0xff]
    %v289 = vld [vmem:[#allocation2 + $0x614] sm:$0xf]
    %v290 = vld [vmem:[#allocation2 + $0x618] sm:$0xff]
    %v291 = vld [vmem:[#allocation2 + $0x620] sm:$0xff]
    %v292 = vld [vmem:[#allocation2 + $0x628] sm:$0xf]
    %v293 = vld [vmem:[#allocation2 + $0x62c] sm:$0xff]
    %v294 = vld [vmem:[#allocation2 + $0x634] sm:$0xff]
    %v295 = vld [vmem:[#allocation2 + $0x63c] sm:$0xf]
    %v296 = vld [vmem:[#allocation2 + $0x640] sm:$0xff]
    %v297 = vld [vmem:[#allocation2 + $0x648] sm:$0xff]
    %v298 = vld [vmem:[#allocation2 + $0x650] sm:$0xf]
    %v299 = vld [vmem:[#allocation2 + $0x654] sm:$0xff]
    %v300 = vld [vmem:[#allocation2 + $0x65c] sm:$0xff]
    %v301 = vld [vmem:[#allocation2 + $0x664] sm:$0xf]
    %v302 = vld [vmem:[#allocation2 + $0x668] sm:$0xff]
    %v303 = vld [vmem:[#allocation2 + $0x670] sm:$0xff]
    %v304 = vld [vmem:[#allocation2 + $0x678] sm:$0xf]
    %v305 = vld [vmem:[#allocation2 + $0x67c] sm:$0xff]
    %v306 = vld [vmem:[#allocation2 + $0x684] sm:$0xff]
    %v307 = vld [vmem:[#allocation2 + $0x68c] sm:$0xf]
    %v308 = vld [vmem:[#allocation2 + $0x690] sm:$0xff]
    %v309 = vld [vmem:[#allocation2 + $0x698] sm:$0xff]
    %v310 = vld [vmem:[#allocation2 + $0x6a0] sm:$0xf]
    %v311 = vld [vmem:[#allocation2 + $0x6a4] sm:$0xff]
    %v312 = vld [vmem:[#allocation2 + $0x6ac] sm:$0xff]
    %v313 = vld [vmem:[#allocation2 + $0x6b4] sm:$0xf]
    %v314 = vld [vmem:[#allocation2 + $0x6b8] sm:$0xff]
    %v315 = vld [vmem:[#allocation2 + $0x6c0] sm:$0xff]
    %v316 = vld [vmem:[#allocation2 + $0x6c8] sm:$0xf]
    %v317 = vld [vmem:[#allocation2 + $0x6cc] sm:$0xff]
    %v318 = vld [vmem:[#allocation2 + $0x6d4] sm:$0xff]
    %v319 = vld [vmem:[#allocation2 + $0x6dc] sm:$0xf]
    %v320 = vld [vmem:[#allocation2 + $0x6e0] sm:$0xff]
    %v321 = vld [vmem:[#allocation2 + $0x6e8] sm:$0xff]
    %v322 = vld [vmem:[#allocation2 + $0x6f0] sm:$0xf]
    %v323 = vld [vmem:[#allocation2 + $0x6f4] sm:$0xff]
    %v324 = vld [vmem:[#allocation2 + $0x6fc] sm:$0xff]
    %v325 = vld [vmem:[#allocation2 + $0x704] sm:$0xf]
    %v326 = vld [vmem:[#allocation2 + $0x708] sm:$0xff]
    %v327 = vld [vmem:[#allocation2 + $0x710] sm:$0xff]
    %v328 = vld [vmem:[#allocation2 + $0x718] sm:$0xf]
    %v329 = vld [vmem:[#allocation2 + $0x71c] sm:$0xff]
    %v330 = vld [vmem:[#allocation2 + $0x724] sm:$0xff]
    %v331 = vld [vmem:[#allocation2 + $0x72c] sm:$0xf]
    %v332 = vld [vmem:[#allocation2 + $0x730] sm:$0xff]
    %v333 = vld [vmem:[#allocation2 + $0x738] sm:$0xff]
    %v334 = vld [vmem:[#allocation2 + $0x740] sm:$0xf]
    %v335 = vld [vmem:[#allocation2 + $0x744] sm:$0xff]
    %v336 = vld [vmem:[#allocation2 + $0x74c] sm:$0xff]
    %v337 = vld [vmem:[#allocation2 + $0x754] sm:$0xf]
    %v338 = vld [vmem:[#allocation2 + $0x758] sm:$0xff]
    %v339 = vld [vmem:[#allocation2 + $0x760] sm:$0xff]
    %v340 = vld [vmem:[#allocation2 + $0x768] sm:$0xf]
    %v341 = vld [vmem:[#allocation2 + $0x76c] sm:$0xff]
    %v342 = vld [vmem:[#allocation2 + $0x774] sm:$0xff]
    %v343 = vld [vmem:[#allocation2 + $0x77c] sm:$0xf]
    %v344 = vld [vmem:[#allocation2 + $0x780] sm:$0xff]
    %v345 = vld [vmem:[#allocation2 + $0x788] sm:$0xff]
    %v346 = vld [vmem:[#allocation2 + $0x790] sm:$0xf]
    %v347 = vld [vmem:[#allocation2 + $0x794] sm:$0xff]
    %v348 = vld [vmem:[#allocation2 + $0x79c] sm:$0xff]
    %v349 = vld [vmem:[#allocation2 + $0x7a4] sm:$0xf]
    %v350 = vld [vmem:[%s2] sm:$0x1f]
    %v352 = vlaneseq
    %v353 = vshrl.u32 %v352, 7
    %v354 = vsub.s32 0, %v353
    %v355 = vrot.slane %v350, %v354
    %v356 = vlaneseq
    %v357 = vshrl.u32 %v356, 7
    %v358 = vsub.s32 1, %v357
    %v359 = vrot.slane %v350, %v358
    %v360 = vlaneseq
    %v361 = vshrl.u32 %v360, 7
    %v362 = vsub.s32 2, %v361
    %v363 = vrot.slane %v350, %v362
    %v364 = vlaneseq
    %v365 = vshrl.u32 %v364, 7
    %v366 = vsub.s32 3, %v365
    %v367 = vrot.slane %v350, %v366
    %v368 = vlaneseq
    %v369 = vshrl.u32 %v368, 7
    %v370 = vsub.s32 4, %v369
    %v371 = vrot.slane %v350, %v370
    %v671 = vunpack.c.l.b16 %v56
    %v672 = vunpack.c.h.b16 %v56
    %v673 = vunpack.c.l.b16 %v57
    %v674 = vunpack.c.h.b16 %v57
    %v675 = vunpack.c.l.b16 %v58
    %v676 = vunpack.c.l.b16 %v59
    %v677 = vunpack.c.h.b16 %v59
    %v678 = vunpack.c.l.b16 %v60
    %v679 = vunpack.c.h.b16 %v60
    %v680 = vunpack.c.l.b16 %v61
    %v681 = vunpack.c.l.b16 %v62
    %v682 = vunpack.c.h.b16 %v62
    %v683 = vunpack.c.l.b16 %v63
    %v684 = vunpack.c.h.b16 %v63
    %v685 = vunpack.c.l.b16 %v64
    %v686 = vunpack.c.l.b16 %v65
    %v687 = vunpack.c.h.b16 %v65
    %v688 = vunpack.c.l.b16 %v66
    %v689 = vunpack.c.h.b16 %v66
    %v690 = vunpack.c.l.b16 %v67
    %v691 = vunpack.c.l.b16 %v68
    %v692 = vunpack.c.h.b16 %v68
    %v693 = vunpack.c.l.b16 %v69
    %v694 = vunpack.c.h.b16 %v69
    %v695 = vunpack.c.l.b16 %v70
    %v696 = vunpack.c.l.b16 %v71
    %v697 = vunpack.c.h.b16 %v71
    %v698 = vunpack.c.l.b16 %v72
    %v699 = vunpack.c.h.b16 %v72
    %v700 = vunpack.c.l.b16 %v73
    %v701 = vunpack.c.l.b16 %v74
    %v702 = vunpack.c.h.b16 %v74
    %v703 = vunpack.c.l.b16 %v75
    %v704 = vunpack.c.h.b16 %v75
    %v705 = vunpack.c.l.b16 %v76
    %v706 = vunpack.c.l.b16 %v77
    %v707 = vunpack.c.h.b16 %v77
    %v708 = vunpack.c.l.b16 %v78
    %v709 = vunpack.c.h.b16 %v78
    %v710 = vunpack.c.l.b16 %v79
    %v711 = vunpack.c.l.b16 %v80
    %v712 = vunpack.c.h.b16 %v80
    %v713 = vunpack.c.l.b16 %v81
    %v714 = vunpack.c.h.b16 %v81
    %v715 = vunpack.c.l.b16 %v82
    %v716 = vunpack.c.l.b16 %v83
    %v717 = vunpack.c.h.b16 %v83
    %v718 = vunpack.c.l.b16 %v84
    %v719 = vunpack.c.h.b16 %v84
    %v720 = vunpack.c.l.b16 %v85
    %v721 = vunpack.c.l.b16 %v86
    %v722 = vunpack.c.h.b16 %v86
    %v723 = vunpack.c.l.b16 %v87
    %v724 = vunpack.c.h.b16 %v87
    %v725 = vunpack.c.l.b16 %v88
    %v726 = vunpack.c.l.b16 %v89
    %v727 = vunpack.c.h.b16 %v89
    %v728 = vunpack.c.l.b16 %v90
    %v729 = vunpack.c.h.b16 %v90
    %v730 = vunpack.c.l.b16 %v91
    %v731 = vunpack.c.l.b16 %v92
    %v732 = vunpack.c.h.b16 %v92
    %v733 = vunpack.c.l.b16 %v93
    %v734 = vunpack.c.h.b16 %v93
    %v735 = vunpack.c.l.b16 %v94
    %v736 = vunpack.c.l.b16 %v95
    %v737 = vunpack.c.h.b16 %v95
    %v738 = vunpack.c.l.b16 %v96
    %v739 = vunpack.c.h.b16 %v96
    %v740 = vunpack.c.l.b16 %v97
    %v741 = vunpack.c.l.b16 %v98
    %v742 = vunpack.c.h.b16 %v98
    %v743 = vunpack.c.l.b16 %v99
    %v744 = vunpack.c.h.b16 %v99
    %v745 = vunpack.c.l.b16 %v100
    %v746 = vunpack.c.l.b16 %v101
    %v747 = vunpack.c.h.b16 %v101
    %v748 = vunpack.c.l.b16 %v102
    %v749 = vunpack.c.h.b16 %v102
    %v750 = vunpack.c.l.b16 %v103
    %v751 = vunpack.c.l.b16 %v104
    %v752 = vunpack.c.h.b16 %v104
    %v753 = vunpack.c.l.b16 %v105
    %v754 = vunpack.c.h.b16 %v105
    %v755 = vunpack.c.l.b16 %v106
    %v756 = vunpack.c.l.b16 %v107
    %v757 = vunpack.c.h.b16 %v107
    %v758 = vunpack.c.l.b16 %v108
    %v759 = vunpack.c.h.b16 %v108
    %v760 = vunpack.c.l.b16 %v109
    %v761 = vunpack.c.l.b16 %v110
    %v762 = vunpack.c.h.b16 %v110
    %v763 = vunpack.c.l.b16 %v111
    %v764 = vunpack.c.h.b16 %v111
    %v765 = vunpack.c.l.b16 %v112
    %v766 = vunpack.c.l.b16 %v113
    %v767 = vunpack.c.h.b16 %v113
    %v768 = vunpack.c.l.b16 %v114
    %v769 = vunpack.c.h.b16 %v114
    %v770 = vunpack.c.l.b16 %v115
    %v771 = vunpack.c.l.b16 %v116
    %v772 = vunpack.c.h.b16 %v116
    %v773 = vunpack.c.l.b16 %v117
    %v774 = vunpack.c.h.b16 %v117
    %v775 = vunpack.c.l.b16 %v118
    %v776 = vunpack.c.l.b16 %v119
    %v777 = vunpack.c.h.b16 %v119
    %v778 = vunpack.c.l.b16 %v120
    %v779 = vunpack.c.h.b16 %v120
    %v780 = vunpack.c.l.b16 %v121
    %v781 = vunpack.c.l.b16 %v122
    %v782 = vunpack.c.h.b16 %v122
    %v783 = vunpack.c.l.b16 %v123
    %v784 = vunpack.c.h.b16 %v123
    %v785 = vunpack.c.l.b16 %v124
    %v786 = vunpack.c.l.b16 %v125
    %v787 = vunpack.c.h.b16 %v125
    %v788 = vunpack.c.l.b16 %v126
    %v789 = vunpack.c.h.b16 %v126
    %v790 = vunpack.c.l.b16 %v127
    %v791 = vunpack.c.l.b16 %v128
    %v792 = vunpack.c.h.b16 %v128
    %v793 = vunpack.c.l.b16 %v129
    %v794 = vunpack.c.h.b16 %v129
    %v795 = vunpack.c.l.b16 %v130
    %v796 = vunpack.c.l.b16 %v131
    %v797 = vunpack.c.h.b16 %v131
    %v798 = vunpack.c.l.b16 %v132
    %v799 = vunpack.c.h.b16 %v132
    %v800 = vunpack.c.l.b16 %v133
    %v801 = vunpack.c.l.b16 %v134
    %v802 = vunpack.c.h.b16 %v134
    %v803 = vunpack.c.l.b16 %v135
    %v804 = vunpack.c.h.b16 %v135
    %v805 = vunpack.c.l.b16 %v136
    %v806 = vunpack.c.l.b16 %v137
    %v807 = vunpack.c.h.b16 %v137
    %v808 = vunpack.c.l.b16 %v138
    %v809 = vunpack.c.h.b16 %v138
    %v810 = vunpack.c.l.b16 %v139
    %v811 = vunpack.c.l.b16 %v140
    %v812 = vunpack.c.h.b16 %v140
    %v813 = vunpack.c.l.b16 %v141
    %v814 = vunpack.c.h.b16 %v141
    %v815 = vunpack.c.l.b16 %v142
    %v816 = vunpack.c.l.b16 %v143
    %v817 = vunpack.c.h.b16 %v143
    %v818 = vunpack.c.l.b16 %v144
    %v819 = vunpack.c.h.b16 %v144
    %v820 = vunpack.c.l.b16 %v145
    %v821 = vunpack.c.l.b16 %v146
    %v822 = vunpack.c.h.b16 %v146
    %v823 = vunpack.c.l.b16 %v147
    %v824 = vunpack.c.h.b16 %v147
    %v825 = vunpack.c.l.b16 %v148
    %v826 = vunpack.c.l.b16 %v149
    %v827 = vunpack.c.h.b16 %v149
    %v828 = vunpack.c.l.b16 %v150
    %v829 = vunpack.c.h.b16 %v150
    %v830 = vunpack.c.l.b16 %v151
    %v831 = vunpack.c.l.b16 %v152
    %v832 = vunpack.c.h.b16 %v152
    %v833 = vunpack.c.l.b16 %v153
    %v834 = vunpack.c.h.b16 %v153
    %v835 = vunpack.c.l.b16 %v154
    %v836 = vunpack.c.l.b16 %v155
    %v837 = vunpack.c.h.b16 %v155
    %v838 = vunpack.c.l.b16 %v156
    %v839 = vunpack.c.h.b16 %v156
    %v840 = vunpack.c.l.b16 %v157
    %v841 = vunpack.c.l.b16 %v158
    %v842 = vunpack.c.h.b16 %v158
    %v843 = vunpack.c.l.b16 %v159
    %v844 = vunpack.c.h.b16 %v159
    %v845 = vunpack.c.l.b16 %v160
    %v846 = vunpack.c.l.b16 %v161
    %v847 = vunpack.c.h.b16 %v161
    %v848 = vunpack.c.l.b16 %v162
    %v849 = vunpack.c.h.b16 %v162
    %v850 = vunpack.c.l.b16 %v163
    %v851 = vunpack.c.l.b16 %v164
    %v852 = vunpack.c.h.b16 %v164
    %v853 = vunpack.c.l.b16 %v165
    %v854 = vunpack.c.h.b16 %v165
    %v855 = vunpack.c.l.b16 %v166
    %v856 = vunpack.c.l.b16 %v167
    %v857 = vunpack.c.h.b16 %v167
    %v858 = vunpack.c.l.b16 %v168
    %v859 = vunpack.c.h.b16 %v168
    %v860 = vunpack.c.l.b16 %v169
    %v861 = vunpack.c.l.b16 %v170
    %v862 = vunpack.c.h.b16 %v170
    %v863 = vunpack.c.l.b16 %v171
    %v864 = vunpack.c.h.b16 %v171
    %v865 = vunpack.c.l.b16 %v172
    %v866 = vunpack.c.l.b16 %v173
    %v867 = vunpack.c.h.b16 %v173
    %v868 = vunpack.c.l.b16 %v174
    %v869 = vunpack.c.h.b16 %v174
    %v870 = vunpack.c.l.b16 %v175
    %v871 = vunpack.c.l.b16 %v176
    %v872 = vunpack.c.h.b16 %v176
    %v873 = vunpack.c.l.b16 %v177
    %v874 = vunpack.c.h.b16 %v177
    %v875 = vunpack.c.l.b16 %v178
    %v876 = vunpack.c.l.b16 %v179
    %v877 = vunpack.c.h.b16 %v179
    %v878 = vunpack.c.l.b16 %v180
    %v879 = vunpack.c.h.b16 %v180
    %v880 = vunpack.c.l.b16 %v181
    %v881 = vunpack.c.l.b16 %v182
    %v882 = vunpack.c.h.b16 %v182
    %v883 = vunpack.c.l.b16 %v183
    %v884 = vunpack.c.h.b16 %v183
    %v885 = vunpack.c.l.b16 %v184
    %v886 = vunpack.c.l.b16 %v185
    %v887 = vunpack.c.h.b16 %v185
    %v888 = vunpack.c.l.b16 %v186
    %v889 = vunpack.c.h.b16 %v186
    %v890 = vunpack.c.l.b16 %v187
    %v891 = vunpack.c.l.b16 %v188
    %v892 = vunpack.c.h.b16 %v188
    %v893 = vunpack.c.l.b16 %v189
    %v894 = vunpack.c.h.b16 %v189
    %v895 = vunpack.c.l.b16 %v190
    %v896 = vunpack.c.l.b16 %v191
    %v897 = vunpack.c.h.b16 %v191
    %v898 = vunpack.c.l.b16 %v192
    %v899 = vunpack.c.h.b16 %v192
    %v900 = vunpack.c.l.b16 %v193
    %v901 = vunpack.c.l.b16 %v194
    %v902 = vunpack.c.h.b16 %v194
    %v903 = vunpack.c.l.b16 %v195
    %v904 = vunpack.c.h.b16 %v195
    %v905 = vunpack.c.l.b16 %v196
    %v906 = vunpack.c.l.b16 %v197
    %v907 = vunpack.c.h.b16 %v197
    %v908 = vunpack.c.l.b16 %v198
    %v909 = vunpack.c.h.b16 %v198
    %v910 = vunpack.c.l.b16 %v199
    %v911 = vunpack.c.l.b16 %v200
    %v912 = vunpack.c.h.b16 %v200
    %v913 = vunpack.c.l.b16 %v201
    %v914 = vunpack.c.h.b16 %v201
    %v915 = vunpack.c.l.b16 %v202
    %v916 = vunpack.c.l.b16 %v203
    %v917 = vunpack.c.h.b16 %v203
    %v918 = vunpack.c.l.b16 %v204
    %v919 = vunpack.c.h.b16 %v204
    %v920 = vunpack.c.l.b16 %v205
    %v921 = vunpack.c.l.b16 %v206
    %v922 = vunpack.c.h.b16 %v206
    %v923 = vunpack.c.l.b16 %v207
    %v924 = vunpack.c.h.b16 %v207
    %v925 = vunpack.c.l.b16 %v208
    %v926 = vunpack.c.l.b16 %v209
    %v927 = vunpack.c.h.b16 %v209
    %v928 = vunpack.c.l.b16 %v210
    %v929 = vunpack.c.h.b16 %v210
    %v930 = vunpack.c.l.b16 %v211
    %v931 = vunpack.c.l.b16 %v212
    %v932 = vunpack.c.h.b16 %v212
    %v933 = vunpack.c.l.b16 %v213
    %v934 = vunpack.c.h.b16 %v213
    %v935 = vunpack.c.l.b16 %v214
    %v936 = vunpack.c.l.b16 %v215
    %v937 = vunpack.c.h.b16 %v215
    %v938 = vunpack.c.l.b16 %v216
    %v939 = vunpack.c.h.b16 %v216
    %v940 = vunpack.c.l.b16 %v217
    %v941 = vunpack.c.l.b16 %v218
    %v942 = vunpack.c.h.b16 %v218
    %v943 = vunpack.c.l.b16 %v219
    %v944 = vunpack.c.h.b16 %v219
    %v945 = vunpack.c.l.b16 %v220
    %v946 = vunpack.c.l.b16 %v221
    %v947 = vunpack.c.h.b16 %v221
    %v948 = vunpack.c.l.b16 %v222
    %v949 = vunpack.c.h.b16 %v222
    %v950 = vunpack.c.l.b16 %v223
    %v951 = vunpack.c.l.b16 %v224
    %v952 = vunpack.c.h.b16 %v224
    %v953 = vunpack.c.l.b16 %v225
    %v954 = vunpack.c.h.b16 %v225
    %v955 = vunpack.c.l.b16 %v226
    %v956 = vunpack.c.l.b16 %v227
    %v957 = vunpack.c.h.b16 %v227
    %v958 = vunpack.c.l.b16 %v228
    %v959 = vunpack.c.h.b16 %v228
    %v960 = vunpack.c.l.b16 %v229
    %v961 = vunpack.c.l.b16 %v230
    %v962 = vunpack.c.h.b16 %v230
    %v963 = vunpack.c.l.b16 %v231
    %v964 = vunpack.c.h.b16 %v231
    %v965 = vunpack.c.l.b16 %v232
    %v966 = vunpack.c.l.b16 %v233
    %v967 = vunpack.c.h.b16 %v233
    %v968 = vunpack.c.l.b16 %v234
    %v969 = vunpack.c.h.b16 %v234
    %v970 = vunpack.c.l.b16 %v235
    %v971 = vunpack.c.l.b16 %v236
    %v972 = vunpack.c.h.b16 %v236
    %v973 = vunpack.c.l.b16 %v237
    %v974 = vunpack.c.h.b16 %v237
    %v975 = vunpack.c.l.b16 %v238
    %v976 = vunpack.c.l.b16 %v239
    %v977 = vunpack.c.h.b16 %v239
    %v978 = vunpack.c.l.b16 %v240
    %v979 = vunpack.c.h.b16 %v240
    %v980 = vunpack.c.l.b16 %v241
    %v981 = vunpack.c.l.b16 %v242
    %v982 = vunpack.c.h.b16 %v242
    %v983 = vunpack.c.l.b16 %v243
    %v984 = vunpack.c.h.b16 %v243
    %v985 = vunpack.c.l.b16 %v244
    %v986 = vunpack.c.l.b16 %v245
    %v987 = vunpack.c.h.b16 %v245
    %v988 = vunpack.c.l.b16 %v246
    %v989 = vunpack.c.h.b16 %v246
    %v990 = vunpack.c.l.b16 %v247
    %v991 = vunpack.c.l.b16 %v248
    %v992 = vunpack.c.h.b16 %v248
    %v993 = vunpack.c.l.b16 %v249
    %v994 = vunpack.c.h.b16 %v249
    %v995 = vunpack.c.l.b16 %v250
    %v996 = vunpack.c.l.b16 %v251
    %v997 = vunpack.c.h.b16 %v251
    %v998 = vunpack.c.l.b16 %v252
    %v999 = vunpack.c.h.b16 %v252
    %v1000 = vunpack.c.l.b16 %v253
    %v1001 = vunpack.c.l.b16 %v254
    %v1002 = vunpack.c.h.b16 %v254
    %v1003 = vunpack.c.l.b16 %v255
    %v1004 = vunpack.c.h.b16 %v255
    %v1005 = vunpack.c.l.b16 %v256
    %v1006 = vunpack.c.l.b16 %v257
    %v1007 = vunpack.c.h.b16 %v257
    %v1008 = vunpack.c.l.b16 %v258
    %v1009 = vunpack.c.h.b16 %v258
    %v1010 = vunpack.c.l.b16 %v259
    %v1011 = vunpack.c.l.b16 %v260
    %v1012 = vunpack.c.h.b16 %v260
    %v1013 = vunpack.c.l.b16 %v261
    %v1014 = vunpack.c.h.b16 %v261
    %v1015 = vunpack.c.l.b16 %v262
    %v1016 = vunpack.c.l.b16 %v263
    %v1017 = vunpack.c.h.b16 %v263
    %v1018 = vunpack.c.l.b16 %v264
    %v1019 = vunpack.c.h.b16 %v264
    %v1020 = vunpack.c.l.b16 %v265
    %v1021 = vunpack.c.l.b16 %v266
    %v1022 = vunpack.c.h.b16 %v266
    %v1023 = vunpack.c.l.b16 %v267
    %v1024 = vunpack.c.h.b16 %v267
    %v1025 = vunpack.c.l.b16 %v268
    %v1026 = vunpack.c.l.b16 %v269
    %v1027 = vunpack.c.h.b16 %v269
    %v1028 = vunpack.c.l.b16 %v270
    %v1029 = vunpack.c.h.b16 %v270
    %v1030 = vunpack.c.l.b16 %v271
    %v1031 = vunpack.c.l.b16 %v272
    %v1032 = vunpack.c.h.b16 %v272
    %v1033 = vunpack.c.l.b16 %v273
    %v1034 = vunpack.c.h.b16 %v273
    %v1035 = vunpack.c.l.b16 %v274
    %v1036 = vunpack.c.l.b16 %v275
    %v1037 = vunpack.c.h.b16 %v275
    %v1038 = vunpack.c.l.b16 %v276
    %v1039 = vunpack.c.h.b16 %v276
    %v1040 = vunpack.c.l.b16 %v277
    %v1041 = vunpack.c.l.b16 %v278
    %v1042 = vunpack.c.h.b16 %v278
    %v1043 = vunpack.c.l.b16 %v279
    %v1044 = vunpack.c.h.b16 %v279
    %v1045 = vunpack.c.l.b16 %v280
    %v1046 = vunpack.c.l.b16 %v281
    %v1047 = vunpack.c.h.b16 %v281
    %v1048 = vunpack.c.l.b16 %v282
    %v1049 = vunpack.c.h.b16 %v282
    %v1050 = vunpack.c.l.b16 %v283
    %v1051 = vunpack.c.l.b16 %v284
    %v1052 = vunpack.c.h.b16 %v284
    %v1053 = vunpack.c.l.b16 %v285
    %v1054 = vunpack.c.h.b16 %v285
    %v1055 = vunpack.c.l.b16 %v286
    %v1056 = vunpack.c.l.b16 %v287
    %v1057 = vunpack.c.h.b16 %v287
    %v1058 = vunpack.c.l.b16 %v288
    %v1059 = vunpack.c.h.b16 %v288
    %v1060 = vunpack.c.l.b16 %v289
    %v1061 = vunpack.c.l.b16 %v290
    %v1062 = vunpack.c.h.b16 %v290
    %v1063 = vunpack.c.l.b16 %v291
    %v1064 = vunpack.c.h.b16 %v291
    %v1065 = vunpack.c.l.b16 %v292
    %v1066 = vunpack.c.l.b16 %v293
    %v1067 = vunpack.c.h.b16 %v293
    %v1068 = vunpack.c.l.b16 %v294
    %v1069 = vunpack.c.h.b16 %v294
    %v1070 = vunpack.c.l.b16 %v295
    %v1071 = vunpack.c.l.b16 %v296
    %v1072 = vunpack.c.h.b16 %v296
    %v1073 = vunpack.c.l.b16 %v297
    %v1074 = vunpack.c.h.b16 %v297
    %v1075 = vunpack.c.l.b16 %v298
    %v1076 = vunpack.c.l.b16 %v299
    %v1077 = vunpack.c.h.b16 %v299
    %v1078 = vunpack.c.l.b16 %v300
    %v1079 = vunpack.c.h.b16 %v300
    %v1080 = vunpack.c.l.b16 %v301
    %v1081 = vunpack.c.l.b16 %v302
    %v1082 = vunpack.c.h.b16 %v302
    %v1083 = vunpack.c.l.b16 %v303
    %v1084 = vunpack.c.h.b16 %v303
    %v1085 = vunpack.c.l.b16 %v304
    %v1086 = vunpack.c.l.b16 %v305
    %v1087 = vunpack.c.h.b16 %v305
    %v1088 = vunpack.c.l.b16 %v306
    %v1089 = vunpack.c.h.b16 %v306
    %v1090 = vunpack.c.l.b16 %v307
    %v1091 = vunpack.c.l.b16 %v308
    %v1092 = vunpack.c.h.b16 %v308
    %v1093 = vunpack.c.l.b16 %v309
    %v1094 = vunpack.c.h.b16 %v309
    %v1095 = vunpack.c.l.b16 %v310
    %v1096 = vunpack.c.l.b16 %v311
    %v1097 = vunpack.c.h.b16 %v311
    %v1098 = vunpack.c.l.b16 %v312
    %v1099 = vunpack.c.h.b16 %v312
    %v1100 = vunpack.c.l.b16 %v313
    %v1101 = vunpack.c.l.b16 %v314
    %v1102 = vunpack.c.h.b16 %v314
    %v1103 = vunpack.c.l.b16 %v315
    %v1104 = vunpack.c.h.b16 %v315
    %v1105 = vunpack.c.l.b16 %v316
    %v1106 = vunpack.c.l.b16 %v317
    %v1107 = vunpack.c.h.b16 %v317
    %v1108 = vunpack.c.l.b16 %v318
    %v1109 = vunpack.c.h.b16 %v318
    %v1110 = vunpack.c.l.b16 %v319
    %v1111 = vunpack.c.l.b16 %v320
    %v1112 = vunpack.c.h.b16 %v320
    %v1113 = vunpack.c.l.b16 %v321
    %v1114 = vunpack.c.h.b16 %v321
    %v1115 = vunpack.c.l.b16 %v322
    %v1116 = vunpack.c.l.b16 %v323
    %v1117 = vunpack.c.h.b16 %v323
    %v1118 = vunpack.c.l.b16 %v324
    %v1119 = vunpack.c.h.b16 %v324
    %v1120 = vunpack.c.l.b16 %v325
    %v1121 = vunpack.c.l.b16 %v326
    %v1122 = vunpack.c.h.b16 %v326
    %v1123 = vunpack.c.l.b16 %v327
    %v1124 = vunpack.c.h.b16 %v327
    %v1125 = vunpack.c.l.b16 %v328
    %v1126 = vunpack.c.l.b16 %v329
    %v1127 = vunpack.c.h.b16 %v329
    %v1128 = vunpack.c.l.b16 %v330
    %v1129 = vunpack.c.h.b16 %v330
    %v1130 = vunpack.c.l.b16 %v331
    %v1131 = vunpack.c.l.b16 %v332
    %v1132 = vunpack.c.h.b16 %v332
    %v1133 = vunpack.c.l.b16 %v333
    %v1134 = vunpack.c.h.b16 %v333
    %v1135 = vunpack.c.l.b16 %v334
    %v1136 = vunpack.c.l.b16 %v335
    %v1137 = vunpack.c.h.b16 %v335
    %v1138 = vunpack.c.l.b16 %v336
    %v1139 = vunpack.c.h.b16 %v336
    %v1140 = vunpack.c.l.b16 %v337
    %v1141 = vunpack.c.l.b16 %v338
    %v1142 = vunpack.c.h.b16 %v338
    %v1143 = vunpack.c.l.b16 %v339
    %v1144 = vunpack.c.h.b16 %v339
    %v1145 = vunpack.c.l.b16 %v340
    %v1146 = vunpack.c.l.b16 %v341
    %v1147 = vunpack.c.h.b16 %v341
    %v1148 = vunpack.c.l.b16 %v342
    %v1149 = vunpack.c.h.b16 %v342
    %v1150 = vunpack.c.l.b16 %v343
    %v1151 = vunpack.c.l.b16 %v344
    %v1152 = vunpack.c.h.b16 %v344
    %v1153 = vunpack.c.l.b16 %v345
    %v1154 = vunpack.c.h.b16 %v345
    %v1155 = vunpack.c.l.b16 %v346
    %v1156 = vunpack.c.l.b16 %v347
    %v1157 = vunpack.c.h.b16 %v347
    %v1158 = vunpack.c.l.b16 %v348
    %v1159 = vunpack.c.h.b16 %v348
    %v1160 = vunpack.c.l.b16 %v349
    %v1161 = vpack.c.b16 %v676, %v671
    %v1162 = vpack.c.b16 %v677, %v672
    %v1163 = vpack.c.b16 %v678, %v673
    %v1164 = vpack.c.b16 %v679, %v674
    %v1165 = vpack.c.b16 %v680, %v675
    %v1166 = vpack.c.b16 %v686, %v681
    %v1167 = vpack.c.b16 %v687, %v682
    %v1168 = vpack.c.b16 %v688, %v683
    %v1169 = vpack.c.b16 %v689, %v684
    %v1170 = vpack.c.b16 %v690, %v685
    %v1171 = vpack.c.b16 %v696, %v691
    %v1172 = vpack.c.b16 %v697, %v692
    %v1173 = vpack.c.b16 %v698, %v693
    %v1174 = vpack.c.b16 %v699, %v694
    %v1175 = vpack.c.b16 %v700, %v695
    %v1176 = vpack.c.b16 %v706, %v701
    %v1177 = vpack.c.b16 %v707, %v702
    %v1178 = vpack.c.b16 %v708, %v703
    %v1179 = vpack.c.b16 %v709, %v704
    %v1180 = vpack.c.b16 %v710, %v705
    %v1181 = vpack.c.b16 %v716, %v711
    %v1182 = vpack.c.b16 %v717, %v712
    %v1183 = vpack.c.b16 %v718, %v713
    %v1184 = vpack.c.b16 %v719, %v714
    %v1185 = vpack.c.b16 %v720, %v715
    %v1186 = vpack.c.b16 %v726, %v721
    %v1187 = vpack.c.b16 %v727, %v722
    %v1188 = vpack.c.b16 %v728, %v723
    %v1189 = vpack.c.b16 %v729, %v724
    %v1190 = vpack.c.b16 %v730, %v725
    %v1191 = vpack.c.b16 %v736, %v731
    %v1192 = vpack.c.b16 %v737, %v732
    %v1193 = vpack.c.b16 %v738, %v733
    %v1194 = vpack.c.b16 %v739, %v734
    %v1195 = vpack.c.b16 %v740, %v735
    %v1196 = vpack.c.b16 %v746, %v741
    %v1197 = vpack.c.b16 %v747, %v742
    %v1198 = vpack.c.b16 %v748, %v743
    %v1199 = vpack.c.b16 %v749, %v744
    %v1200 = vpack.c.b16 %v750, %v745
    %v1201 = vpack.c.b16 %v756, %v751
    %v1202 = vpack.c.b16 %v757, %v752
    %v1203 = vpack.c.b16 %v758, %v753
    %v1204 = vpack.c.b16 %v759, %v754
    %v1205 = vpack.c.b16 %v760, %v755
    %v1206 = vpack.c.b16 %v766, %v761
    %v1207 = vpack.c.b16 %v767, %v762
    %v1208 = vpack.c.b16 %v768, %v763
    %v1209 = vpack.c.b16 %v769, %v764
    %v1210 = vpack.c.b16 %v770, %v765
    %v1211 = vpack.c.b16 %v776, %v771
    %v1212 = vpack.c.b16 %v777, %v772
    %v1213 = vpack.c.b16 %v778, %v773
    %v1214 = vpack.c.b16 %v779, %v774
    %v1215 = vpack.c.b16 %v780, %v775
    %v1216 = vpack.c.b16 %v786, %v781
    %v1217 = vpack.c.b16 %v787, %v782
    %v1218 = vpack.c.b16 %v788, %v783
    %v1219 = vpack.c.b16 %v789, %v784
    %v1220 = vpack.c.b16 %v790, %v785
    %v1221 = vpack.c.b16 %v796, %v791
    %v1222 = vpack.c.b16 %v797, %v792
    %v1223 = vpack.c.b16 %v798, %v793
    %v1224 = vpack.c.b16 %v799, %v794
    %v1225 = vpack.c.b16 %v800, %v795
    %v1226 = vpack.c.b16 %v806, %v801
    %v1227 = vpack.c.b16 %v807, %v802
    %v1228 = vpack.c.b16 %v808, %v803
    %v1229 = vpack.c.b16 %v809, %v804
    %v1230 = vpack.c.b16 %v810, %v805
    %v1231 = vpack.c.b16 %v816, %v811
    %v1232 = vpack.c.b16 %v817, %v812
    %v1233 = vpack.c.b16 %v818, %v813
    %v1234 = vpack.c.b16 %v819, %v814
    %v1235 = vpack.c.b16 %v820, %v815
    %v1236 = vpack.c.b16 %v826, %v821
    %v1237 = vpack.c.b16 %v827, %v822
    %v1238 = vpack.c.b16 %v828, %v823
    %v1239 = vpack.c.b16 %v829, %v824
    %v1240 = vpack.c.b16 %v830, %v825
    %v1241 = vpack.c.b16 %v836, %v831
    %v1242 = vpack.c.b16 %v837, %v832
    %v1243 = vpack.c.b16 %v838, %v833
    %v1244 = vpack.c.b16 %v839, %v834
    %v1245 = vpack.c.b16 %v840, %v835
    %v1246 = vpack.c.b16 %v846, %v841
    %v1247 = vpack.c.b16 %v847, %v842
    %v1248 = vpack.c.b16 %v848, %v843
    %v1249 = vpack.c.b16 %v849, %v844
    %v1250 = vpack.c.b16 %v850, %v845
    %v1251 = vpack.c.b16 %v856, %v851
    %v1252 = vpack.c.b16 %v857, %v852
    %v1253 = vpack.c.b16 %v858, %v853
    %v1254 = vpack.c.b16 %v859, %v854
    %v1255 = vpack.c.b16 %v860, %v855
    %v1256 = vpack.c.b16 %v866, %v861
    %v1257 = vpack.c.b16 %v867, %v862
    %v1258 = vpack.c.b16 %v868, %v863
    %v1259 = vpack.c.b16 %v869, %v864
    %v1260 = vpack.c.b16 %v870, %v865
    %v1261 = vpack.c.b16 %v876, %v871
    %v1262 = vpack.c.b16 %v877, %v872
    %v1263 = vpack.c.b16 %v878, %v873
    %v1264 = vpack.c.b16 %v879, %v874
    %v1265 = vpack.c.b16 %v880, %v875
    %v1266 = vpack.c.b16 %v886, %v881
    %v1267 = vpack.c.b16 %v887, %v882
    %v1268 = vpack.c.b16 %v888, %v883
    %v1269 = vpack.c.b16 %v889, %v884
    %v1270 = vpack.c.b16 %v890, %v885
    %v1271 = vpack.c.b16 %v896, %v891
    %v1272 = vpack.c.b16 %v897, %v892
    %v1273 = vpack.c.b16 %v898, %v893
    %v1274 = vpack.c.b16 %v899, %v894
    %v1275 = vpack.c.b16 %v900, %v895
    %v1276 = vpack.c.b16 %v906, %v901
    %v1277 = vpack.c.b16 %v907, %v902
    %v1278 = vpack.c.b16 %v908, %v903
    %v1279 = vpack.c.b16 %v909, %v904
    %v1280 = vpack.c.b16 %v910, %v905
    %v1281 = vpack.c.b16 %v916, %v911
    %v1282 = vpack.c.b16 %v917, %v912
    %v1283 = vpack.c.b16 %v918, %v913
    %v1284 = vpack.c.b16 %v919, %v914
    %v1285 = vpack.c.b16 %v920, %v915
    %v1286 = vpack.c.b16 %v926, %v921
    %v1287 = vpack.c.b16 %v927, %v922
    %v1288 = vpack.c.b16 %v928, %v923
    %v1289 = vpack.c.b16 %v929, %v924
    %v1290 = vpack.c.b16 %v930, %v925
    %v1291 = vpack.c.b16 %v936, %v931
    %v1292 = vpack.c.b16 %v937, %v932
    %v1293 = vpack.c.b16 %v938, %v933
    %v1294 = vpack.c.b16 %v939, %v934
    %v1295 = vpack.c.b16 %v940, %v935
    %v1296 = vpack.c.b16 %v946, %v941
    %v1297 = vpack.c.b16 %v947, %v942
    %v1298 = vpack.c.b16 %v948, %v943
    %v1299 = vpack.c.b16 %v949, %v944
    %v1300 = vpack.c.b16 %v950, %v945
    %v1301 = vpack.c.b16 %v956, %v951
    %v1302 = vpack.c.b16 %v957, %v952
    %v1303 = vpack.c.b16 %v958, %v953
    %v1304 = vpack.c.b16 %v959, %v954
    %v1305 = vpack.c.b16 %v960, %v955
    %v1306 = vpack.c.b16 %v966, %v961
    %v1307 = vpack.c.b16 %v967, %v962
    %v1308 = vpack.c.b16 %v968, %v963
    %v1309 = vpack.c.b16 %v969, %v964
    %v1310 = vpack.c.b16 %v970, %v965
    %v1311 = vpack.c.b16 %v976, %v971
    %v1312 = vpack.c.b16 %v977, %v972
    %v1313 = vpack.c.b16 %v978, %v973
    %v1314 = vpack.c.b16 %v979, %v974
    %v1315 = vpack.c.b16 %v980, %v975
    %v1316 = vpack.c.b16 %v986, %v981
    %v1317 = vpack.c.b16 %v987, %v982
    %v1318 = vpack.c.b16 %v988, %v983
    %v1319 = vpack.c.b16 %v989, %v984
    %v1320 = vpack.c.b16 %v990, %v985
    %v1321 = vpack.c.b16 %v996, %v991
    %v1322 = vpack.c.b16 %v997, %v992
    %v1323 = vpack.c.b16 %v998, %v993
    %v1324 = vpack.c.b16 %v999, %v994
    %v1325 = vpack.c.b16 %v1000, %v995
    %v1326 = vpack.c.b16 %v1006, %v1001
    %v1327 = vpack.c.b16 %v1007, %v1002
    %v1328 = vpack.c.b16 %v1008, %v1003
    %v1329 = vpack.c.b16 %v1009, %v1004
    %v1330 = vpack.c.b16 %v1010, %v1005
    %v1331 = vpack.c.b16 %v1016, %v1011
    %v1332 = vpack.c.b16 %v1017, %v1012
    %v1333 = vpack.c.b16 %v1018, %v1013
    %v1334 = vpack.c.b16 %v1019, %v1014
    %v1335 = vpack.c.b16 %v1020, %v1015
    %v1336 = vpack.c.b16 %v1026, %v1021
    %v1337 = vpack.c.b16 %v1027, %v1022
    %v1338 = vpack.c.b16 %v1028, %v1023
    %v1339 = vpack.c.b16 %v1029, %v1024
    %v1340 = vpack.c.b16 %v1030, %v1025
    %v1341 = vpack.c.b16 %v1036, %v1031
    %v1342 = vpack.c.b16 %v1037, %v1032
    %v1343 = vpack.c.b16 %v1038, %v1033
    %v1344 = vpack.c.b16 %v1039, %v1034
    %v1345 = vpack.c.b16 %v1040, %v1035
    %v1346 = vpack.c.b16 %v1046, %v1041
    %v1347 = vpack.c.b16 %v1047, %v1042
    %v1348 = vpack.c.b16 %v1048, %v1043
    %v1349 = vpack.c.b16 %v1049, %v1044
    %v1350 = vpack.c.b16 %v1050, %v1045
    %v1351 = vpack.c.b16 %v1056, %v1051
    %v1352 = vpack.c.b16 %v1057, %v1052
    %v1353 = vpack.c.b16 %v1058, %v1053
    %v1354 = vpack.c.b16 %v1059, %v1054
    %v1355 = vpack.c.b16 %v1060, %v1055
    %v1356 = vpack.c.b16 %v1066, %v1061
    %v1357 = vpack.c.b16 %v1067, %v1062
    %v1358 = vpack.c.b16 %v1068, %v1063
    %v1359 = vpack.c.b16 %v1069, %v1064
    %v1360 = vpack.c.b16 %v1070, %v1065
    %v1361 = vpack.c.b16 %v1076, %v1071
    %v1362 = vpack.c.b16 %v1077, %v1072
    %v1363 = vpack.c.b16 %v1078, %v1073
    %v1364 = vpack.c.b16 %v1079, %v1074
    %v1365 = vpack.c.b16 %v1080, %v1075
    %v1366 = vpack.c.b16 %v1086, %v1081
    %v1367 = vpack.c.b16 %v1087, %v1082
    %v1368 = vpack.c.b16 %v1088, %v1083
    %v1369 = vpack.c.b16 %v1089, %v1084
    %v1370 = vpack.c.b16 %v1090, %v1085
    %v1371 = vpack.c.b16 %v1096, %v1091
    %v1372 = vpack.c.b16 %v1097, %v1092
    %v1373 = vpack.c.b16 %v1098, %v1093
    %v1374 = vpack.c.b16 %v1099, %v1094
    %v1375 = vpack.c.b16 %v1100, %v1095
    %v1376 = vpack.c.b16 %v1106, %v1101
    %v1377 = vpack.c.b16 %v1107, %v1102
    %v1378 = vpack.c.b16 %v1108, %v1103
    %v1379 = vpack.c.b16 %v1109, %v1104
    %v1380 = vpack.c.b16 %v1110, %v1105
    %v1381 = vpack.c.b16 %v1116, %v1111
    %v1382 = vpack.c.b16 %v1117, %v1112
    %v1383 = vpack.c.b16 %v1118, %v1113
    %v1384 = vpack.c.b16 %v1119, %v1114
    %v1385 = vpack.c.b16 %v1120, %v1115
    %v1386 = vpack.c.b16 %v1126, %v1121
    %v1387 = vpack.c.b16 %v1127, %v1122
    %v1388 = vpack.c.b16 %v1128, %v1123
    %v1389 = vpack.c.b16 %v1129, %v1124
    %v1390 = vpack.c.b16 %v1130, %v1125
    %v1391 = vpack.c.b16 %v1136, %v1131
    %v1392 = vpack.c.b16 %v1137, %v1132
    %v1393 = vpack.c.b16 %v1138, %v1133
    %v1394 = vpack.c.b16 %v1139, %v1134
    %v1395 = vpack.c.b16 %v1140, %v1135
    %v1396 = vpack.c.b16 %v1146, %v1141
    %v1397 = vpack.c.b16 %v1147, %v1142
    %v1398 = vpack.c.b16 %v1148, %v1143
    %v1399 = vpack.c.b16 %v1149, %v1144
    %v1400 = vpack.c.b16 %v1150, %v1145
    %v1401 = vpack.c.b16 %v1156, %v1151
    %v1402 = vpack.c.b16 %v1157, %v1152
    %v1403 = vpack.c.b16 %v1158, %v1153
    %v1404 = vpack.c.b16 %v1159, %v1154
    %v1405 = vpack.c.b16 %v1160, %v1155
    %vm1651 = vcmask 130048
    %v1653 = vsel %vm1651, %v55, 0
    %1655 = vmatprep.subr.bf16.mxu0 %v1162
    %1656 = vmatpush1.bf16.msra.mxu0 %v1161
    %1657 = vmatprep.subr.bf16.mxu0 %v1167
    %1658 = vmatpush1.bf16.msra.mxu0 %v1166
    %1659 = vmatprep.subr.bf16.mxu0 %v1172
    %1660 = vmatpush1.bf16.msra.mxu0 %v1171
    %1661 = vmatprep.subr.bf16.mxu0 %v1177
    %1662 = vmatpush1.bf16.msra.mxu0 %v1176
    %1663 = vmatprep.subr.bf16.mxu0 %v1182
    %1664 = vmatpush1.bf16.msra.mxu0 %v1181
    %1665 = vmatprep.subr.bf16.mxu0 %v1187
    %1666 = vmatpush1.bf16.msra.mxu0 %v1186
    %1667 = vmatprep.subr.bf16.mxu0 %v1192
    %1668 = vmatpush1.bf16.msra.mxu0 %v1191
    %1669 = vmatprep.subr.bf16.mxu0 %v1197
    %1670 = vmatpush1.bf16.msra.mxu0 %v1196
    %1671 = vmatprep.subr.bf16.mxu0 %v1202
    %1672 = vmatpush1.bf16.msra.mxu0 %v1201
    %1673 = vmatprep.subr.bf16.mxu0 %v1207
    %1674 = vmatpush1.bf16.msra.mxu0 %v1206
    %1675 = vmatprep.subr.bf16.mxu0 %v1212
    %1676 = vmatpush1.bf16.msra.mxu0 %v1211
    %1677 = vmatprep.subr.bf16.mxu0 %v1217
    %1678 = vmatpush1.bf16.msra.mxu0 %v1216
    %1679 = vmatprep.subr.bf16.mxu0 %v1222
    %1680 = vmatpush1.bf16.msra.mxu0 %v1221
    %1681 = vmatprep.subr.bf16.mxu0 %v1227
    %1682 = vmatpush1.bf16.msra.mxu0 %v1226
    %1683 = vmatprep.subr.bf16.mxu0 %v1232
    %1684 = vmatpush1.bf16.msra.mxu0 %v1231
    %1685 = vmatprep.subr.bf16.mxu0 %v1237
    %1686 = vmatpush1.bf16.msra.mxu0 %v1236
    %1687 = vmatprep.mubr.bf16.mxu0 %v50
    %1688 = vmatmul.mubr.bf16.gmra.mrb[0].mxu0 %v49
    %v1689 = vpop.f32.mrb[0].mxu0
    %v1690 = vadd.f32 %v355, %v1689
    %v1691 = vpop.f32.mrb[0].mxu0
    %v1692 = vadd.f32 %v359, %v1691
    %v1693 = vpop.f32.mrb[0].mxu0
    %v1694 = vpop.f32.mrb[0].mxu0
    %1695 = vdwg.mxu0
    %1696 = vmatprep.subr.bf16.mxu0 %v1242
    %1697 = vmatpush1.bf16.msra.mxu0 %v1241
    %1698 = vmatprep.subr.bf16.mxu0 %v1247
    %1699 = vmatpush1.bf16.msra.mxu0 %v1246
    %1700 = vmatprep.subr.bf16.mxu0 %v1252
    %1701 = vmatpush1.bf16.msra.mxu0 %v1251
    %1702 = vmatprep.subr.bf16.mxu0 %v1257
    %1703 = vmatpush1.bf16.msra.mxu0 %v1256
    %1704 = vmatprep.subr.bf16.mxu0 %v1262
    %1705 = vmatpush1.bf16.msra.mxu0 %v1261
    %1706 = vmatprep.subr.bf16.mxu0 %v1267
    %1707 = vmatpush1.bf16.msra.mxu0 %v1266
    %1708 = vmatprep.subr.bf16.mxu0 %v1272
    %1709 = vmatpush1.bf16.msra.mxu0 %v1271
    %1710 = vmatprep.subr.bf16.mxu0 %v1277
    %1711 = vmatpush1.bf16.msra.mxu0 %v1276
    %1712 = vmatprep.subr.bf16.mxu0 %v1282
    %1713 = vmatpush1.bf16.msra.mxu0 %v1281
    %1714 = vmatprep.subr.bf16.mxu0 %v1287
    %1715 = vmatpush1.bf16.msra.mxu0 %v1286
    %1716 = vmatprep.subr.bf16.mxu0 %v1292
    %1717 = vmatpush1.bf16.msra.mxu0 %v1291
    %1718 = vmatprep.subr.bf16.mxu0 %v1297
    %1719 = vmatpush1.bf16.msra.mxu0 %v1296
    %1720 = vmatprep.subr.bf16.mxu0 %v1302
    %1721 = vmatpush1.bf16.msra.mxu0 %v1301
    %1722 = vmatprep.subr.bf16.mxu0 %v1307
    %1723 = vmatpush1.bf16.msra.mxu0 %v1306
    %1724 = vmatprep.subr.bf16.mxu0 %v1312
    %1725 = vmatpush1.bf16.msra.mxu0 %v1311
    %1726 = vmatprep.subr.bf16.mxu0 %v1317
    %1727 = vmatpush1.bf16.msra.mxu0 %v1316
    %1728 = vmatprep.mubr.bf16.mxu0 %v52
    %1729 = vmatmul.mubr.bf16.gmra.mrb[0].mxu0 %v51
    %v1730 = vpop.f32.mrb[0].mxu0
    %v1731 = vadd.f32 %v1690, %v1730
    %v1732 = vpop.f32.mrb[0].mxu0
    %v1733 = vadd.f32 %v1692, %v1732
    %v1734 = vpop.f32.mrb[0].mxu0
    %v1735 = vpop.f32.mrb[0].mxu0
    %1736 = vdwg.mxu0
    %1737 = vmatprep.subr.bf16.mxu0 %v1322
    %1738 = vmatpush1.bf16.msra.mxu0 %v1321
    %1739 = vmatprep.subr.bf16.mxu0 %v1327
    %1740 = vmatpush1.bf16.msra.mxu0 %v1326
    %1741 = vmatprep.subr.bf16.mxu0 %v1332
    %1742 = vmatpush1.bf16.msra.mxu0 %v1331
    %1743 = vmatprep.subr.bf16.mxu0 %v1337
    %1744 = vmatpush1.bf16.msra.mxu0 %v1336
    %1745 = vmatprep.subr.bf16.mxu0 %v1342
    %1746 = vmatpush1.bf16.msra.mxu0 %v1341
    %1747 = vmatprep.subr.bf16.mxu0 %v1347
    %1748 = vmatpush1.bf16.msra.mxu0 %v1346
    %1749 = vmatprep.subr.bf16.mxu0 %v1352
    %1750 = vmatpush1.bf16.msra.mxu0 %v1351
    %1751 = vmatprep.subr.bf16.mxu0 %v1357
    %1752 = vmatpush1.bf16.msra.mxu0 %v1356
    %1753 = vmatprep.subr.bf16.mxu0 %v1362
    %1754 = vmatpush1.bf16.msra.mxu0 %v1361
    %1755 = vmatprep.subr.bf16.mxu0 %v1367
    %1756 = vmatpush1.bf16.msra.mxu0 %v1366
    %1757 = vmatprep.subr.bf16.mxu0 %v1372
    %1758 = vmatpush1.bf16.msra.mxu0 %v1371
    %1759 = vmatprep.subr.bf16.mxu0 %v1377
    %1760 = vmatpush1.bf16.msra.mxu0 %v1376
    %1761 = vmatprep.subr.bf16.mxu0 %v1382
    %1762 = vmatpush1.bf16.msra.mxu0 %v1381
    %1763 = vmatprep.subr.bf16.mxu0 %v1387
    %1764 = vmatpush1.bf16.msra.mxu0 %v1386
    %1765 = vmatprep.subr.bf16.mxu0 %v1392
    %1766 = vmatpush1.bf16.msra.mxu0 %v1391
    %1767 = vmatprep.subr.bf16.mxu0 %v1397
    %1768 = vmatpush1.bf16.msra.mxu0 %v1396
    %1769 = vmatprep.mubr.bf16.mxu0 %v54
    %1770 = vmatmul.mubr.bf16.gmra.mrb[0].mxu0 %v53
    %v1771 = vpop.f32.mrb[0].mxu0
    %v1772 = vadd.f32 %v1731, %v1771
    %v1773 = vpop.f32.mrb[0].mxu0
    %v1774 = vadd.f32 %v1733, %v1773
    %v1775 = vpop.f32.mrb[0].mxu0
    %v1776 = vpop.f32.mrb[0].mxu0
    %1777 = vdwg.mxu0
    %1778 = vmatprep.subr.bf16.mxu0 %v1402
    %1779 = vmatpush1.bf16.msra.mxu0 %v1401
    %1780 = vmatprep.subr.bf16.mxu0 0
    %1781 = vmatpush1.bf16.msra.mxu0 0
    %1782 = vmatprep.subr.bf16.mxu0 0
    %1783 = vmatpush1.bf16.msra.mxu0 0
    %1784 = vmatprep.subr.bf16.mxu0 0
    %1785 = vmatpush1.bf16.msra.mxu0 0
    %1786 = vmatprep.subr.bf16.mxu0 0
    %1787 = vmatpush1.bf16.msra.mxu0 0
    %1788 = vmatprep.subr.bf16.mxu0 0
    %1789 = vmatpush1.bf16.msra.mxu0 0
    %1790 = vmatprep.subr.bf16.mxu0 0
    %1791 = vmatpush1.bf16.msra.mxu0 0
    %1792 = vmatprep.subr.bf16.mxu0 0
    %1793 = vmatpush1.bf16.msra.mxu0 0
    %1794 = vmatprep.subr.bf16.mxu0 0
    %1795 = vmatpush1.bf16.msra.mxu0 0
    %1796 = vmatprep.subr.bf16.mxu0 0
    %1797 = vmatpush1.bf16.msra.mxu0 0
    %1798 = vmatprep.subr.bf16.mxu0 0
    %1799 = vmatpush1.bf16.msra.mxu0 0
    %1800 = vmatprep.subr.bf16.mxu0 0
    %1801 = vmatpush1.bf16.msra.mxu0 0
    %1802 = vmatprep.subr.bf16.mxu0 0
    %1803 = vmatpush1.bf16.msra.mxu0 0
    %1804 = vmatprep.subr.bf16.mxu0 0
    %1805 = vmatpush1.bf16.msra.mxu0 0
    %1806 = vmatprep.subr.bf16.mxu0 0
    %1807 = vmatpush1.bf16.msra.mxu0 0
    %1808 = vmatprep.subr.bf16.mxu0 0
    %1809 = vmatpush1.bf16.msra.mxu0 0
    %1810 = vmatprep.mubr.bf16.mxu0 0
    %1811 = vmatmul.mubr.bf16.gmra.mrb[0].mxu0 %v1653
    %v1812 = vpop.f32.mrb[0].mxu0
    %v1813 = vadd.f32 %v1772, %v1812
    %v1814 = vpop.f32.mrb[0].mxu0
    %v1815 = vadd.f32 %v1774, %v1814
    %v1816 = vpop.f32.mrb[0].mxu0
    %v1817 = vpop.f32.mrb[0].mxu0
    %1818 = vdwg.mxu0
    %1819 = vmatprep.subr.bf16.mxu0 %v1164
    %1820 = vmatpush1.bf16.msra.mxu0 %v1163
    %1821 = vmatprep.subr.bf16.mxu0 %v1169
    %1822 = vmatpush1.bf16.msra.mxu0 %v1168
    %1823 = vmatprep.subr.bf16.mxu0 %v1174
    %1824 = vmatpush1.bf16.msra.mxu0 %v1173
    %1825 = vmatprep.subr.bf16.mxu0 %v1179
    %1826 = vmatpush1.bf16.msra.mxu0 %v1178
    %1827 = vmatprep.subr.bf16.mxu0 %v1184
    %1828 = vmatpush1.bf16.msra.mxu0 %v1183
    %1829 = vmatprep.subr.bf16.mxu0 %v1189
    %1830 = vmatpush1.bf16.msra.mxu0 %v1188
    %1831 = vmatprep.subr.bf16.mxu0 %v1194
    %1832 = vmatpush1.bf16.msra.mxu0 %v1193
    %1833 = vmatprep.subr.bf16.mxu0 %v1199
    %1834 = vmatpush1.bf16.msra.mxu0 %v1198
    %1835 = vmatprep.subr.bf16.mxu0 %v1204
    %1836 = vmatpush1.bf16.msra.mxu0 %v1203
    %1837 = vmatprep.subr.bf16.mxu0 %v1209
    %1838 = vmatpush1.bf16.msra.mxu0 %v1208
    %1839 = vmatprep.subr.bf16.mxu0 %v1214
    %1840 = vmatpush1.bf16.msra.mxu0 %v1213
    %1841 = vmatprep.subr.bf16.mxu0 %v1219
    %1842 = vmatpush1.bf16.msra.mxu0 %v1218
    %1843 = vmatprep.subr.bf16.mxu0 %v1224
    %1844 = vmatpush1.bf16.msra.mxu0 %v1223
    %1845 = vmatprep.subr.bf16.mxu0 %v1229
    %1846 = vmatpush1.bf16.msra.mxu0 %v1228
    %1847 = vmatprep.subr.bf16.mxu0 %v1234
    %1848 = vmatpush1.bf16.msra.mxu0 %v1233
    %1849 = vmatprep.subr.bf16.mxu0 %v1239
    %1850 = vmatpush1.bf16.msra.mxu0 %v1238
    %1851 = vmatprep.mubr.bf16.mxu0 %v50
    %1852 = vmatmul.mubr.bf16.gmra.mrb[0].mxu0 %v49
    %v1853 = vpop.f32.mrb[0].mxu0
    %v1854 = vadd.f32 %v363, %v1853
    %v1855 = vpop.f32.mrb[0].mxu0
    %v1856 = vadd.f32 %v367, %v1855
    %v1857 = vpop.f32.mrb[0].mxu0
    %v1858 = vpop.f32.mrb[0].mxu0
    %1859 = vdwg.mxu0
    %1860 = vmatprep.subr.bf16.mxu0 %v1244
    %1861 = vmatpush1.bf16.msra.mxu0 %v1243
    %1862 = vmatprep.subr.bf16.mxu0 %v1249
    %1863 = vmatpush1.bf16.msra.mxu0 %v1248
    %1864 = vmatprep.subr.bf16.mxu0 %v1254
    %1865 = vmatpush1.bf16.msra.mxu0 %v1253
    %1866 = vmatprep.subr.bf16.mxu0 %v1259
    %1867 = vmatpush1.bf16.msra.mxu0 %v1258
    %1868 = vmatprep.subr.bf16.mxu0 %v1264
    %1869 = vmatpush1.bf16.msra.mxu0 %v1263
    %1870 = vmatprep.subr.bf16.mxu0 %v1269
    %1871 = vmatpush1.bf16.msra.mxu0 %v1268
    %1872 = vmatprep.subr.bf16.mxu0 %v1274
    %1873 = vmatpush1.bf16.msra.mxu0 %v1273
    %1874 = vmatprep.subr.bf16.mxu0 %v1279
    %1875 = vmatpush1.bf16.msra.mxu0 %v1278
    %1876 = vmatprep.subr.bf16.mxu0 %v1284
    %1877 = vmatpush1.bf16.msra.mxu0 %v1283
    %1878 = vmatprep.subr.bf16.mxu0 %v1289
    %1879 = vmatpush1.bf16.msra.mxu0 %v1288
    %1880 = vmatprep.subr.bf16.mxu0 %v1294
    %1881 = vmatpush1.bf16.msra.mxu0 %v1293
    %1882 = vmatprep.subr.bf16.mxu0 %v1299
    %1883 = vmatpush1.bf16.msra.mxu0 %v1298
    %1884 = vmatprep.subr.bf16.mxu0 %v1304
    %1885 = vmatpush1.bf16.msra.mxu0 %v1303
    %1886 = vmatprep.subr.bf16.mxu0 %v1309
    %1887 = vmatpush1.bf16.msra.mxu0 %v1308
    %1888 = vmatprep.subr.bf16.mxu0 %v1314
    %1889 = vmatpush1.bf16.msra.mxu0 %v1313
    %1890 = vmatprep.subr.bf16.mxu0 %v1319
    %1891 = vmatpush1.bf16.msra.mxu0 %v1318
    %1892 = vmatprep.mubr.bf16.mxu0 %v52
    %1893 = vmatmul.mubr.bf16.gmra.mrb[0].mxu0 %v51
    %v1894 = vpop.f32.mrb[0].mxu0
    %v1895 = vadd.f32 %v1854, %v1894
    %v1896 = vpop.f32.mrb[0].mxu0
    %v1897 = vadd.f32 %v1856, %v1896
    %v1898 = vpop.f32.mrb[0].mxu0
    %v1899 = vpop.f32.mrb[0].mxu0
    %1900 = vdwg.mxu0
    %1901 = vmatprep.subr.bf16.mxu0 %v1324
    %1902 = vmatpush1.bf16.msra.mxu0 %v1323
    %1903 = vmatprep.subr.bf16.mxu0 %v1329
    %1904 = vmatpush1.bf16.msra.mxu0 %v1328
    %1905 = vmatprep.subr.bf16.mxu0 %v1334
    %1906 = vmatpush1.bf16.msra.mxu0 %v1333
    %1907 = vmatprep.subr.bf16.mxu0 %v1339
    %1908 = vmatpush1.bf16.msra.mxu0 %v1338
    %1909 = vmatprep.subr.bf16.mxu0 %v1344
    %1910 = vmatpush1.bf16.msra.mxu0 %v1343
    %1911 = vmatprep.subr.bf16.mxu0 %v1349
    %1912 = vmatpush1.bf16.msra.mxu0 %v1348
    %1913 = vmatprep.subr.bf16.mxu0 %v1354
    %1914 = vmatpush1.bf16.msra.mxu0 %v1353
    %1915 = vmatprep.subr.bf16.mxu0 %v1359
    %1916 = vmatpush1.bf16.msra.mxu0 %v1358
    %1917 = vmatprep.subr.bf16.mxu0 %v1364
    %1918 = vmatpush1.bf16.msra.mxu0 %v1363
    %1919 = vmatprep.subr.bf16.mxu0 %v1369
    %1920 = vmatpush1.bf16.msra.mxu0 %v1368
    %1921 = vmatprep.subr.bf16.mxu0 %v1374
    %1922 = vmatpush1.bf16.msra.mxu0 %v1373
    %1923 = vmatprep.subr.bf16.mxu0 %v1379
    %1924 = vmatpush1.bf16.msra.mxu0 %v1378
    %1925 = vmatprep.subr.bf16.mxu0 %v1384
    %1926 = vmatpush1.bf16.msra.mxu0 %v1383
    %1927 = vmatprep.subr.bf16.mxu0 %v1389
    %1928 = vmatpush1.bf16.msra.mxu0 %v1388
    %1929 = vmatprep.subr.bf16.mxu0 %v1394
    %1930 = vmatpush1.bf16.msra.mxu0 %v1393
    %1931 = vmatprep.subr.bf16.mxu0 %v1399
    %1932 = vmatpush1.bf16.msra.mxu0 %v1398
    %1933 = vmatprep.mubr.bf16.mxu0 %v54
    %1934 = vmatmul.mubr.bf16.gmra.mrb[0].mxu0 %v53
    %v1935 = vpop.f32.mrb[0].mxu0
    %v1936 = vadd.f32 %v1895, %v1935
    %v1937 = vpop.f32.mrb[0].mxu0
    %v1938 = vadd.f32 %v1897, %v1937
    %v1939 = vpop.f32.mrb[0].mxu0
    %v1940 = vpop.f32.mrb[0].mxu0
    %1941 = vdwg.mxu0
    %1942 = vmatprep.subr.bf16.mxu0 %v1404
    %1943 = vmatpush1.bf16.msra.mxu0 %v1403
    %1944 = vmatprep.subr.bf16.mxu0 0
    %1945 = vmatpush1.bf16.msra.mxu0 0
    %1946 = vmatprep.subr.bf16.mxu0 0
    %1947 = vmatpush1.bf16.msra.mxu0 0
    %1948 = vmatprep.subr.bf16.mxu0 0
    %1949 = vmatpush1.bf16.msra.mxu0 0
    %1950 = vmatprep.subr.bf16.mxu0 0
    %1951 = vmatpush1.bf16.msra.mxu0 0
    %1952 = vmatprep.subr.bf16.mxu0 0
    %1953 = vmatpush1.bf16.msra.mxu0 0
    %1954 = vmatprep.subr.bf16.mxu0 0
    %1955 = vmatpush1.bf16.msra.mxu0 0
    %1956 = vmatprep.subr.bf16.mxu0 0
    %1957 = vmatpush1.bf16.msra.mxu0 0
    %1958 = vmatprep.subr.bf16.mxu0 0
    %1959 = vmatpush1.bf16.msra.mxu0 0
    %1960 = vmatprep.subr.bf16.mxu0 0
    %1961 = vmatpush1.bf16.msra.mxu0 0
    %1962 = vmatprep.subr.bf16.mxu0 0
    %1963 = vmatpush1.bf16.msra.mxu0 0
    %1964 = vmatprep.subr.bf16.mxu0 0
    %1965 = vmatpush1.bf16.msra.mxu0 0
    %1966 = vmatprep.subr.bf16.mxu0 0
    %1967 = vmatpush1.bf16.msra.mxu0 0
    %1968 = vmatprep.subr.bf16.mxu0 0
    %1969 = vmatpush1.bf16.msra.mxu0 0
    %1970 = vmatprep.subr.bf16.mxu0 0
    %1971 = vmatpush1.bf16.msra.mxu0 0
    %1972 = vmatprep.subr.bf16.mxu0 0
    %1973 = vmatpush1.bf16.msra.mxu0 0
    %1974 = vmatprep.mubr.bf16.mxu0 0
    %1975 = vmatmul.mubr.bf16.gmra.mrb[0].mxu0 %v1653
    %v1976 = vpop.f32.mrb[0].mxu0
    %v1977 = vadd.f32 %v1936, %v1976
    %v1978 = vpop.f32.mrb[0].mxu0
    %v1979 = vadd.f32 %v1938, %v1978
    %v1980 = vpop.f32.mrb[0].mxu0
    %v1981 = vpop.f32.mrb[0].mxu0
    %1982 = vdwg.mxu0
    %1983 = vmatprep.subr.bf16.mxu0 0
    %1984 = vmatpush1.bf16.msra.mxu0 %v1165
    %1985 = vmatprep.subr.bf16.mxu0 0
    %1986 = vmatpush1.bf16.msra.mxu0 %v1170
    %1987 = vmatprep.subr.bf16.mxu0 0
    %1988 = vmatpush1.bf16.msra.mxu0 %v1175
    %1989 = vmatprep.subr.bf16.mxu0 0
    %1990 = vmatpush1.bf16.msra.mxu0 %v1180
    %1991 = vmatprep.subr.bf16.mxu0 0
    %1992 = vmatpush1.bf16.msra.mxu0 %v1185
    %1993 = vmatprep.subr.bf16.mxu0 0
    %1994 = vmatpush1.bf16.msra.mxu0 %v1190
    %1995 = vmatprep.subr.bf16.mxu0 0
    %1996 = vmatpush1.bf16.msra.mxu0 %v1195
    %1997 = vmatprep.subr.bf16.mxu0 0
    %1998 = vmatpush1.bf16.msra.mxu0 %v1200
    %1999 = vmatprep.subr.bf16.mxu0 0
    %2000 = vmatpush1.bf16.msra.mxu0 %v1205
    %2001 = vmatprep.subr.bf16.mxu0 0
    %2002 = vmatpush1.bf16.msra.mxu0 %v1210
    %2003 = vmatprep.subr.bf16.mxu0 0
    %2004 = vmatpush1.bf16.msra.mxu0 %v1215
    %2005 = vmatprep.subr.bf16.mxu0 0
    %2006 = vmatpush1.bf16.msra.mxu0 %v1220
    %2007 = vmatprep.subr.bf16.mxu0 0
    %2008 = vmatpush1.bf16.msra.mxu0 %v1225
    %2009 = vmatprep.subr.bf16.mxu0 0
    %2010 = vmatpush1.bf16.msra.mxu0 %v1230
    %2011 = vmatprep.subr.bf16.mxu0 0
    %2012 = vmatpush1.bf16.msra.mxu0 %v1235
    %2013 = vmatprep.subr.bf16.mxu0 0
    %2014 = vmatpush1.bf16.msra.mxu0 %v1240
    %2015 = vmatprep.mubr.bf16.mxu0 %v50
    %2016 = vmatmul.mubr.bf16.gmra.mrb[0].mxu0 %v49
    %v2017 = vpop.f32.mrb[0].mxu0
    %v2018 = vadd.f32 %v371, %v2017
    %v2019 = vpop.f32.mrb[0].mxu0
    %v2020 = vpop.f32.mrb[0].mxu0
    %v2021 = vpop.f32.mrb[0].mxu0
    %2022 = vdwg.mxu0
    %2023 = vmatprep.subr.bf16.mxu0 0
    %2024 = vmatpush1.bf16.msra.mxu0 %v1245
    %2025 = vmatprep.subr.bf16.mxu0 0
    %2026 = vmatpush1.bf16.msra.mxu0 %v1250
    %2027 = vmatprep.subr.bf16.mxu0 0
    %2028 = vmatpush1.bf16.msra.mxu0 %v1255
    %2029 = vmatprep.subr.bf16.mxu0 0
    %2030 = vmatpush1.bf16.msra.mxu0 %v1260
    %2031 = vmatprep.subr.bf16.mxu0 0
    %2032 = vmatpush1.bf16.msra.mxu0 %v1265
    %2033 = vmatprep.subr.bf16.mxu0 0
    %2034 = vmatpush1.bf16.msra.mxu0 %v1270
    %2035 = vmatprep.subr.bf16.mxu0 0
    %2036 = vmatpush1.bf16.msra.mxu0 %v1275
    %2037 = vmatprep.subr.bf16.mxu0 0
    %2038 = vmatpush1.bf16.msra.mxu0 %v1280
    %2039 = vmatprep.subr.bf16.mxu0 0
    %2040 = vmatpush1.bf16.msra.mxu0 %v1285
    %2041 = vmatprep.subr.bf16.mxu0 0
    %2042 = vmatpush1.bf16.msra.mxu0 %v1290
    %2043 = vmatprep.subr.bf16.mxu0 0
    %2044 = vmatpush1.bf16.msra.mxu0 %v1295
    %2045 = vmatprep.subr.bf16.mxu0 0
    %2046 = vmatpush1.bf16.msra.mxu0 %v1300
    %2047 = vmatprep.subr.bf16.mxu0 0
    %2048 = vmatpush1.bf16.msra.mxu0 %v1305
    %2049 = vmatprep.subr.bf16.mxu0 0
    %2050 = vmatpush1.bf16.msra.mxu0 %v1310
    %2051 = vmatprep.subr.bf16.mxu0 0
    %2052 = vmatpush1.bf16.msra.mxu0 %v1315
    %2053 = vmatprep.subr.bf16.mxu0 0
    %2054 = vmatpush1.bf16.msra.mxu0 %v1320
    %2055 = vmatprep.mubr.bf16.mxu0 %v52
    %2056 = vmatmul.mubr.bf16.gmra.mrb[0].mxu0 %v51
    %v2057 = vpop.f32.mrb[0].mxu0
    %v2058 = vadd.f32 %v2018, %v2057
    %v2059 = vpop.f32.mrb[0].mxu0
    %v2060 = vpop.f32.mrb[0].mxu0
    %v2061 = vpop.f32.mrb[0].mxu0
    %2062 = vdwg.mxu0
    %2063 = vmatprep.subr.bf16.mxu0 0
    %2064 = vmatpush1.bf16.msra.mxu0 %v1325
    %2065 = vmatprep.subr.bf16.mxu0 0
    %2066 = vmatpush1.bf16.msra.mxu0 %v1330
    %2067 = vmatprep.subr.bf16.mxu0 0
    %2068 = vmatpush1.bf16.msra.mxu0 %v1335
    %2069 = vmatprep.subr.bf16.mxu0 0
    %2070 = vmatpush1.bf16.msra.mxu0 %v1340
    %2071 = vmatprep.subr.bf16.mxu0 0
    %2072 = vmatpush1.bf16.msra.mxu0 %v1345
    %2073 = vmatprep.subr.bf16.mxu0 0
    %2074 = vmatpush1.bf16.msra.mxu0 %v1350
    %2075 = vmatprep.subr.bf16.mxu0 0
    %2076 = vmatpush1.bf16.msra.mxu0 %v1355
    %2077 = vmatprep.subr.bf16.mxu0 0
    %2078 = vmatpush1.bf16.msra.mxu0 %v1360
    %2079 = vmatprep.subr.bf16.mxu0 0
    %2080 = vmatpush1.bf16.msra.mxu0 %v1365
    %2081 = vmatprep.subr.bf16.mxu0 0
    %2082 = vmatpush1.bf16.msra.mxu0 %v1370
    %2083 = vmatprep.subr.bf16.mxu0 0
    %2084 = vmatpush1.bf16.msra.mxu0 %v1375
    %2085 = vmatprep.subr.bf16.mxu0 0
    %2086 = vmatpush1.bf16.msra.mxu0 %v1380
    %2087 = vmatprep.subr.bf16.mxu0 0
    %2088 = vmatpush1.bf16.msra.mxu0 %v1385
    %2089 = vmatprep.subr.bf16.mxu0 0
    %2090 = vmatpush1.bf16.msra.mxu0 %v1390
    %2091 = vmatprep.subr.bf16.mxu0 0
    %2092 = vmatpush1.bf16.msra.mxu0 %v1395
    %2093 = vmatprep.subr.bf16.mxu0 0
    %2094 = vmatpush1.bf16.msra.mxu0 %v1400
    %2095 = vmatprep.mubr.bf16.mxu0 %v54
    %2096 = vmatmul.mubr.bf16.gmra.mrb[0].mxu0 %v53
    %v2097 = vpop.f32.mrb[0].mxu0
    %v2098 = vadd.f32 %v2058, %v2097
    %v2099 = vpop.f32.mrb[0].mxu0
    %v2100 = vpop.f32.mrb[0].mxu0
    %v2101 = vpop.f32.mrb[0].mxu0
    %2102 = vdwg.mxu0
    %2103 = vmatprep.subr.bf16.mxu0 0
    %2104 = vmatpush1.bf16.msra.mxu0 %v1405
    %2105 = vmatprep.subr.bf16.mxu0 0
    %2106 = vmatpush1.bf16.msra.mxu0 0
    %2107 = vmatprep.subr.bf16.mxu0 0
    %2108 = vmatpush1.bf16.msra.mxu0 0
    %2109 = vmatprep.subr.bf16.mxu0 0
    %2110 = vmatpush1.bf16.msra.mxu0 0
    %2111 = vmatprep.subr.bf16.mxu0 0
    %2112 = vmatpush1.bf16.msra.mxu0 0
    %2113 = vmatprep.subr.bf16.mxu0 0
    %2114 = vmatpush1.bf16.msra.mxu0 0
    %2115 = vmatprep.subr.bf16.mxu0 0
    %2116 = vmatpush1.bf16.msra.mxu0 0
    %2117 = vmatprep.subr.bf16.mxu0 0
    %2118 = vmatpush1.bf16.msra.mxu0 0
    %2119 = vmatprep.subr.bf16.mxu0 0
    %2120 = vmatpush1.bf16.msra.mxu0 0
    %2121 = vmatprep.subr.bf16.mxu0 0
    %2122 = vmatpush1.bf16.msra.mxu0 0
    %2123 = vmatprep.subr.bf16.mxu0 0
    %2124 = vmatpush1.bf16.msra.mxu0 0
    %2125 = vmatprep.subr.bf16.mxu0 0
    %2126 = vmatpush1.bf16.msra.mxu0 0
    %2127 = vmatprep.subr.bf16.mxu0 0
    %2128 = vmatpush1.bf16.msra.mxu0 0
    %2129 = vmatprep.subr.bf16.mxu0 0
    %2130 = vmatpush1.bf16.msra.mxu0 0
    %2131 = vmatprep.subr.bf16.mxu0 0
    %2132 = vmatpush1.bf16.msra.mxu0 0
    %2133 = vmatprep.subr.bf16.mxu0 0
    %2134 = vmatpush1.bf16.msra.mxu0 0
    %2135 = vmatprep.mubr.bf16.mxu0 0
    %2136 = vmatmul.mubr.bf16.gmra.mrb[0].mxu0 %v1653
    %v2137 = vpop.f32.mrb[0].mxu0
    %v2138 = vadd.f32 %v2098, %v2137
    %v2139 = vpop.f32.mrb[0].mxu0
    %v2140 = vpop.f32.mrb[0].mxu0
    %v2141 = vpop.f32.mrb[0].mxu0
    %2142 = vdwg.mxu0
    %v2143 = vmax.f32 %v1813, 0.0
    %v2144 = vmax.f32 %v1815, 0.0
    %v2145 = vmax.f32 %v1977, 0.0
    %v2146 = vmax.f32 %v1979, 0.0
    %v2147 = vmax.f32 %v2138, 0.0
    %v2148 = vpack.c.bf16 %v2143, %v2143
    %v2149 = vpack.c.bf16 %v2144, %v2144
    %v2150 = vpack.c.bf16 %v2145, %v2145
    %v2151 = vpack.c.bf16 %v2146, %v2146
    %v2152 = vpack.c.bf16 %v2147, %v2147
    %v2153 = vld [vmem:[%s3] sm:$0xf]
    %v2154 = vld [vmem:[%s3 + $0x4] sm:$0xf]
    %v2155 = vld [vmem:[%s3 + $0x8] sm:$0xf]
    %v2156 = vld [vmem:[%s3 + $0xc] sm:$0xf]
    %v2157 = vld [vmem:[%s3 + $0x10] sm:$0xf]
    %v2158 = vld [vmem:[%s3 + $0x14] sm:$0xf]
    %v2159 = vld [vmem:[%s3 + $0x18] sm:$0xf]
    %v2160 = vld [vmem:[%s3 + $0x1c] sm:$0xf]
    %v2161 = vld [vmem:[%s3 + $0x20] sm:$0xf]
    %v2162 = vld [vmem:[%s3 + $0x24] sm:$0xf]
    %v2163 = vld [vmem:[%s3 + $0x28] sm:$0xf]
    %v2164 = vld [vmem:[%s3 + $0x2c] sm:$0xf]
    %v2165 = vld [vmem:[%s3 + $0x30] sm:$0xf]
    %v2166 = vld [vmem:[%s3 + $0x34] sm:$0xf]
    %v2167 = vld [vmem:[%s3 + $0x38] sm:$0xf]
    %v2168 = vld [vmem:[%s3 + $0x3c] sm:$0xf]
    %v2169 = vld [vmem:[%s3 + $0x40] sm:$0xf]
    %v2170 = vld [vmem:[%s3 + $0x44] sm:$0xf]
    %v2171 = vld [vmem:[%s3 + $0x48] sm:$0xf]
    %v2172 = vld [vmem:[%s3 + $0x4c] sm:$0xf]
    %v2173 = vld [vmem:[%s3 + $0x50] sm:$0xf]
    %v2174 = vld [vmem:[%s3 + $0x54] sm:$0xf]
    %v2175 = vld [vmem:[%s3 + $0x58] sm:$0xf]
    %v2176 = vld [vmem:[%s3 + $0x5c] sm:$0xf]
    %v2177 = vld [vmem:[%s3 + $0x60] sm:$0xf]
    %v2178 = vld [vmem:[%s3 + $0x64] sm:$0xf]
    %v2179 = vld [vmem:[%s3 + $0x68] sm:$0xf]
    %v2180 = vld [vmem:[%s3 + $0x6c] sm:$0xf]
    %v2181 = vld [vmem:[%s3 + $0x70] sm:$0xf]
    %v2182 = vld [vmem:[%s3 + $0x74] sm:$0xf]
    %v2183 = vld [vmem:[%s3 + $0x78] sm:$0xf]
    %v2184 = vld [vmem:[%s3 + $0x7c] sm:$0xf]
    %v2185 = vld [vmem:[%s3 + $0x80] sm:$0xf]
    %v2186 = vld [vmem:[%s3 + $0x84] sm:$0xf]
    %v2187 = vld [vmem:[%s3 + $0x88] sm:$0xf]
    %v2188 = vld [vmem:[%s3 + $0x8c] sm:$0xf]
    %v2189 = vld [vmem:[%s3 + $0x90] sm:$0xf]
    %v2190 = vld [vmem:[%s3 + $0x94] sm:$0xf]
    %v2191 = vld [vmem:[%s3 + $0x98] sm:$0xf]
    %v2192 = vld [vmem:[%s3 + $0x9c] sm:$0xf]
    %v2193 = vld [vmem:[%s3 + $0xa0] sm:$0xf]
    %v2194 = vld [vmem:[%s3 + $0xa4] sm:$0xf]
    %v2195 = vld [vmem:[%s3 + $0xa8] sm:$0xf]
    %v2196 = vld [vmem:[%s3 + $0xac] sm:$0xf]
    %v2197 = vld [vmem:[%s3 + $0xb0] sm:$0xf]
    %v2198 = vld [vmem:[%s3 + $0xb4] sm:$0xf]
    %v2199 = vld [vmem:[%s3 + $0xb8] sm:$0xf]
    %v2200 = vld [vmem:[%s3 + $0xbc] sm:$0xf]
    %v2201 = vld [vmem:[%s3 + $0xc0] sm:$0xf]
    %v2202 = vld [vmem:[%s3 + $0xc4] sm:$0xf]
    %v2203 = vld [vmem:[%s3 + $0xc8] sm:$0xf]
    %v2204 = vld [vmem:[%s3 + $0xcc] sm:$0xf]
    %v2205 = vld [vmem:[%s3 + $0xd0] sm:$0xf]
    %v2206 = vld [vmem:[%s3 + $0xd4] sm:$0xf]
    %v2207 = vld [vmem:[%s3 + $0xd8] sm:$0xf]
    %v2208 = vld [vmem:[%s3 + $0xdc] sm:$0xf]
    %v2209 = vld [vmem:[%s3 + $0xe0] sm:$0xf]
    %v2210 = vld [vmem:[%s3 + $0xe4] sm:$0xf]
    %v2211 = vld [vmem:[%s3 + $0xe8] sm:$0xf]
    %v2212 = vld [vmem:[%s3 + $0xec] sm:$0xf]
    %v2213 = vld [vmem:[%s3 + $0xf0] sm:$0xf]
    %v2214 = vld [vmem:[%s3 + $0xf4] sm:$0xf]
    %v2215 = vld [vmem:[%s3 + $0xf8] sm:$0xf]
    %v2216 = vld [vmem:[%s3 + $0xfc] sm:$0xf]
    %v2217 = vld [vmem:[%s3 + $0x100] sm:$0xf]
    %v2218 = vld [vmem:[%s3 + $0x104] sm:$0xf]
    %v2219 = vld [vmem:[%s3 + $0x108] sm:$0xf]
    %v2220 = vld [vmem:[%s3 + $0x10c] sm:$0xf]
    %v2221 = vld [vmem:[%s3 + $0x110] sm:$0xf]
    %v2222 = vld [vmem:[%s3 + $0x114] sm:$0xf]
    %v2223 = vld [vmem:[%s3 + $0x118] sm:$0xf]
    %v2224 = vld [vmem:[%s3 + $0x11c] sm:$0xf]
    %v2225 = vld [vmem:[%s3 + $0x120] sm:$0xf]
    %v2226 = vld [vmem:[%s3 + $0x124] sm:$0xf]
    %v2227 = vld [vmem:[%s3 + $0x128] sm:$0xf]
    %v2228 = vld [vmem:[%s3 + $0x12c] sm:$0xf]
    %v2229 = vld [vmem:[%s3 + $0x130] sm:$0xf]
    %v2230 = vld [vmem:[%s3 + $0x134] sm:$0xf]
    %v2231 = vld [vmem:[%s3 + $0x138] sm:$0xf]
    %v2232 = vld [vmem:[%s3 + $0x13c] sm:$0xf]
    %v2233 = vld [vmem:[%s4] sm:$0x1]
    %v2235 = vlaneseq
    %v2236 = vshrl.u32 %v2235, 7
    %v2237 = vsub.s32 0, %v2236
    %v2238 = vrot.slane %v2233, %v2237
    %v2320 = vunpack.c.l.b16 %v2153
    %v2321 = vunpack.c.l.b16 %v2154
    %v2322 = vunpack.c.l.b16 %v2155
    %v2323 = vunpack.c.l.b16 %v2156
    %v2324 = vunpack.c.l.b16 %v2157
    %v2325 = vunpack.c.l.b16 %v2158
    %v2326 = vunpack.c.l.b16 %v2159
    %v2327 = vunpack.c.l.b16 %v2160
    %v2328 = vunpack.c.l.b16 %v2161
    %v2329 = vunpack.c.l.b16 %v2162
    %v2330 = vunpack.c.l.b16 %v2163
    %v2331 = vunpack.c.l.b16 %v2164
    %v2332 = vunpack.c.l.b16 %v2165
    %v2333 = vunpack.c.l.b16 %v2166
    %v2334 = vunpack.c.l.b16 %v2167
    %v2335 = vunpack.c.l.b16 %v2168
    %v2336 = vunpack.c.l.b16 %v2169
    %v2337 = vunpack.c.l.b16 %v2170
    %v2338 = vunpack.c.l.b16 %v2171
    %v2339 = vunpack.c.l.b16 %v2172
    %v2340 = vunpack.c.l.b16 %v2173
    %v2341 = vunpack.c.l.b16 %v2174
    %v2342 = vunpack.c.l.b16 %v2175
    %v2343 = vunpack.c.l.b16 %v2176
    %v2344 = vunpack.c.l.b16 %v2177
    %v2345 = vunpack.c.l.b16 %v2178
    %v2346 = vunpack.c.l.b16 %v2179
    %v2347 = vunpack.c.l.b16 %v2180
    %v2348 = vunpack.c.l.b16 %v2181
    %v2349 = vunpack.c.l.b16 %v2182
    %v2350 = vunpack.c.l.b16 %v2183
    %v2351 = vunpack.c.l.b16 %v2184
    %v2352 = vunpack.c.l.b16 %v2185
    %v2353 = vunpack.c.l.b16 %v2186
    %v2354 = vunpack.c.l.b16 %v2187
    %v2355 = vunpack.c.l.b16 %v2188
    %v2356 = vunpack.c.l.b16 %v2189
    %v2357 = vunpack.c.l.b16 %v2190
    %v2358 = vunpack.c.l.b16 %v2191
    %v2359 = vunpack.c.l.b16 %v2192
    %v2360 = vunpack.c.l.b16 %v2193
    %v2361 = vunpack.c.l.b16 %v2194
    %v2362 = vunpack.c.l.b16 %v2195
    %v2363 = vunpack.c.l.b16 %v2196
    %v2364 = vunpack.c.l.b16 %v2197
    %v2365 = vunpack.c.l.b16 %v2198
    %v2366 = vunpack.c.l.b16 %v2199
    %v2367 = vunpack.c.l.b16 %v2200
    %v2368 = vunpack.c.l.b16 %v2201
    %v2369 = vunpack.c.l.b16 %v2202
    %v2370 = vunpack.c.l.b16 %v2203
    %v2371 = vunpack.c.l.b16 %v2204
    %v2372 = vunpack.c.l.b16 %v2205
    %v2373 = vunpack.c.l.b16 %v2206
    %v2374 = vunpack.c.l.b16 %v2207
    %v2375 = vunpack.c.l.b16 %v2208
    %v2376 = vunpack.c.l.b16 %v2209
    %v2377 = vunpack.c.l.b16 %v2210
    %v2378 = vunpack.c.l.b16 %v2211
    %v2379 = vunpack.c.l.b16 %v2212
    %v2380 = vunpack.c.l.b16 %v2213
    %v2381 = vunpack.c.l.b16 %v2214
    %v2382 = vunpack.c.l.b16 %v2215
    %v2383 = vunpack.c.l.b16 %v2216
    %v2384 = vunpack.c.l.b16 %v2217
    %v2385 = vunpack.c.l.b16 %v2218
    %v2386 = vunpack.c.l.b16 %v2219
    %v2387 = vunpack.c.l.b16 %v2220
    %v2388 = vunpack.c.l.b16 %v2221
    %v2389 = vunpack.c.l.b16 %v2222
    %v2390 = vunpack.c.l.b16 %v2223
    %v2391 = vunpack.c.l.b16 %v2224
    %v2392 = vunpack.c.l.b16 %v2225
    %v2393 = vunpack.c.l.b16 %v2226
    %v2394 = vunpack.c.l.b16 %v2227
    %v2395 = vunpack.c.l.b16 %v2228
    %v2396 = vunpack.c.l.b16 %v2229
    %v2397 = vunpack.c.l.b16 %v2230
    %v2398 = vunpack.c.l.b16 %v2231
    %v2399 = vunpack.c.l.b16 %v2232
    %v2400 = vpack.c.b16 %v2321, %v2320
    %v2401 = vpack.c.b16 %v2323, %v2322
    %v2402 = vpack.c.b16 %v2325, %v2324
    %v2403 = vpack.c.b16 %v2327, %v2326
    %v2404 = vpack.c.b16 %v2329, %v2328
    %v2405 = vpack.c.b16 %v2331, %v2330
    %v2406 = vpack.c.b16 %v2333, %v2332
    %v2407 = vpack.c.b16 %v2335, %v2334
    %v2408 = vpack.c.b16 %v2337, %v2336
    %v2409 = vpack.c.b16 %v2339, %v2338
    %v2410 = vpack.c.b16 %v2341, %v2340
    %v2411 = vpack.c.b16 %v2343, %v2342
    %v2412 = vpack.c.b16 %v2345, %v2344
    %v2413 = vpack.c.b16 %v2347, %v2346
    %v2414 = vpack.c.b16 %v2349, %v2348
    %v2415 = vpack.c.b16 %v2351, %v2350
    %v2416 = vpack.c.b16 %v2353, %v2352
    %v2417 = vpack.c.b16 %v2355, %v2354
    %v2418 = vpack.c.b16 %v2357, %v2356
    %v2419 = vpack.c.b16 %v2359, %v2358
    %v2420 = vpack.c.b16 %v2361, %v2360
    %v2421 = vpack.c.b16 %v2363, %v2362
    %v2422 = vpack.c.b16 %v2365, %v2364
    %v2423 = vpack.c.b16 %v2367, %v2366
    %v2424 = vpack.c.b16 %v2369, %v2368
    %v2425 = vpack.c.b16 %v2371, %v2370
    %v2426 = vpack.c.b16 %v2373, %v2372
    %v2427 = vpack.c.b16 %v2375, %v2374
    %v2428 = vpack.c.b16 %v2377, %v2376
    %v2429 = vpack.c.b16 %v2379, %v2378
    %v2430 = vpack.c.b16 %v2381, %v2380
    %v2431 = vpack.c.b16 %v2383, %v2382
    %v2432 = vpack.c.b16 %v2385, %v2384
    %v2433 = vpack.c.b16 %v2387, %v2386
    %v2434 = vpack.c.b16 %v2389, %v2388
    %v2435 = vpack.c.b16 %v2391, %v2390
    %v2436 = vpack.c.b16 %v2393, %v2392
    %v2437 = vpack.c.b16 %v2395, %v2394
    %v2438 = vpack.c.b16 %v2397, %v2396
    %v2439 = vpack.c.b16 %v2399, %v2398
    %2480 = vmatprep.subr.bf16.mxu0 0
    %2481 = vmatpush1.bf16.msra.mxu0 %v2400
    %2482 = vmatprep.subr.bf16.mxu0 0
    %2483 = vmatpush1.bf16.msra.mxu0 %v2401
    %2484 = vmatprep.subr.bf16.mxu0 0
    %2485 = vmatpush1.bf16.msra.mxu0 %v2402
    %2486 = vmatprep.subr.bf16.mxu0 0
    %2487 = vmatpush1.bf16.msra.mxu0 %v2403
    %2488 = vmatprep.subr.bf16.mxu0 0
    %2489 = vmatpush1.bf16.msra.mxu0 %v2404
    %2490 = vmatprep.subr.bf16.mxu0 0
    %2491 = vmatpush1.bf16.msra.mxu0 %v2405
    %2492 = vmatprep.subr.bf16.mxu0 0
    %2493 = vmatpush1.bf16.msra.mxu0 %v2406
    %2494 = vmatprep.subr.bf16.mxu0 0
    %2495 = vmatpush1.bf16.msra.mxu0 %v2407
    %2496 = vmatprep.subr.bf16.mxu0 0
    %2497 = vmatpush1.bf16.msra.mxu0 %v2408
    %2498 = vmatprep.subr.bf16.mxu0 0
    %2499 = vmatpush1.bf16.msra.mxu0 %v2409
    %2500 = vmatprep.subr.bf16.mxu0 0
    %2501 = vmatpush1.bf16.msra.mxu0 %v2410
    %2502 = vmatprep.subr.bf16.mxu0 0
    %2503 = vmatpush1.bf16.msra.mxu0 %v2411
    %2504 = vmatprep.subr.bf16.mxu0 0
    %2505 = vmatpush1.bf16.msra.mxu0 %v2412
    %2506 = vmatprep.subr.bf16.mxu0 0
    %2507 = vmatpush1.bf16.msra.mxu0 %v2413
    %2508 = vmatprep.subr.bf16.mxu0 0
    %2509 = vmatpush1.bf16.msra.mxu0 %v2414
    %2510 = vmatprep.subr.bf16.mxu0 0
    %2511 = vmatpush1.bf16.msra.mxu0 %v2415
    %2512 = vmatprep.mubr.bf16.mxu0 %v2149
    %2513 = vmatmul.mubr.bf16.gmra.mrb[0].mxu0 %v2148
    %v2514 = vpop.f32.mrb[0].mxu0
    %v2515 = vadd.f32 %v2238, %v2514
    %v2516 = vpop.f32.mrb[0].mxu0
    %v2517 = vpop.f32.mrb[0].mxu0
    %v2518 = vpop.f32.mrb[0].mxu0
    %2519 = vdwg.mxu0
    %2520 = vmatprep.subr.bf16.mxu0 0
    %2521 = vmatpush1.bf16.msra.mxu0 %v2416
    %2522 = vmatprep.subr.bf16.mxu0 0
    %2523 = vmatpush1.bf16.msra.mxu0 %v2417
    %2524 = vmatprep.subr.bf16.mxu0 0
    %2525 = vmatpush1.bf16.msra.mxu0 %v2418
    %2526 = vmatprep.subr.bf16.mxu0 0
    %2527 = vmatpush1.bf16.msra.mxu0 %v2419
    %2528 = vmatprep.subr.bf16.mxu0 0
    %2529 = vmatpush1.bf16.msra.mxu0 %v2420
    %2530 = vmatprep.subr.bf16.mxu0 0
    %2531 = vmatpush1.bf16.msra.mxu0 %v2421
    %2532 = vmatprep.subr.bf16.mxu0 0
    %2533 = vmatpush1.bf16.msra.mxu0 %v2422
    %2534 = vmatprep.subr.bf16.mxu0 0
    %2535 = vmatpush1.bf16.msra.mxu0 %v2423
    %2536 = vmatprep.subr.bf16.mxu0 0
    %2537 = vmatpush1.bf16.msra.mxu0 %v2424
    %2538 = vmatprep.subr.bf16.mxu0 0
    %2539 = vmatpush1.bf16.msra.mxu0 %v2425
    %2540 = vmatprep.subr.bf16.mxu0 0
    %2541 = vmatpush1.bf16.msra.mxu0 %v2426
    %2542 = vmatprep.subr.bf16.mxu0 0
    %2543 = vmatpush1.bf16.msra.mxu0 %v2427
    %2544 = vmatprep.subr.bf16.mxu0 0
    %2545 = vmatpush1.bf16.msra.mxu0 %v2428
    %2546 = vmatprep.subr.bf16.mxu0 0
    %2547 = vmatpush1.bf16.msra.mxu0 %v2429
    %2548 = vmatprep.subr.bf16.mxu0 0
    %2549 = vmatpush1.bf16.msra.mxu0 %v2430
    %2550 = vmatprep.subr.bf16.mxu0 0
    %2551 = vmatpush1.bf16.msra.mxu0 %v2431
    %2552 = vmatprep.mubr.bf16.mxu0 %v2151
    %2553 = vmatmul.mubr.bf16.gmra.mrb[0].mxu0 %v2150
    %v2554 = vpop.f32.mrb[0].mxu0
    %v2555 = vadd.f32 %v2515, %v2554
    %v2556 = vpop.f32.mrb[0].mxu0
    %v2557 = vpop.f32.mrb[0].mxu0
    %v2558 = vpop.f32.mrb[0].mxu0
    %2559 = vdwg.mxu0
    %2560 = vmatprep.subr.bf16.mxu0 0
    %2561 = vmatpush1.bf16.msra.mxu0 %v2432
    %2562 = vmatprep.subr.bf16.mxu0 0
    %2563 = vmatpush1.bf16.msra.mxu0 %v2433
    %2564 = vmatprep.subr.bf16.mxu0 0
    %2565 = vmatpush1.bf16.msra.mxu0 %v2434
    %2566 = vmatprep.subr.bf16.mxu0 0
    %2567 = vmatpush1.bf16.msra.mxu0 %v2435
    %2568 = vmatprep.subr.bf16.mxu0 0
    %2569 = vmatpush1.bf16.msra.mxu0 %v2436
    %2570 = vmatprep.subr.bf16.mxu0 0
    %2571 = vmatpush1.bf16.msra.mxu0 %v2437
    %2572 = vmatprep.subr.bf16.mxu0 0
    %2573 = vmatpush1.bf16.msra.mxu0 %v2438
    %2574 = vmatprep.subr.bf16.mxu0 0
    %2575 = vmatpush1.bf16.msra.mxu0 %v2439
    %2576 = vmatprep.subr.bf16.mxu0 0
    %2577 = vmatpush1.bf16.msra.mxu0 0
    %2578 = vmatprep.subr.bf16.mxu0 0
    %2579 = vmatpush1.bf16.msra.mxu0 0
    %2580 = vmatprep.subr.bf16.mxu0 0
    %2581 = vmatpush1.bf16.msra.mxu0 0
    %2582 = vmatprep.subr.bf16.mxu0 0
    %2583 = vmatpush1.bf16.msra.mxu0 0
    %2584 = vmatprep.subr.bf16.mxu0 0
    %2585 = vmatpush1.bf16.msra.mxu0 0
    %2586 = vmatprep.subr.bf16.mxu0 0
    %2587 = vmatpush1.bf16.msra.mxu0 0
    %2588 = vmatprep.subr.bf16.mxu0 0
    %2589 = vmatpush1.bf16.msra.mxu0 0
    %2590 = vmatprep.subr.bf16.mxu0 0
    %2591 = vmatpush1.bf16.msra.mxu0 0
    %2592 = vmatprep.mubr.bf16.mxu0 0
    %2593 = vmatmul.mubr.bf16.gmra.mrb[0].mxu0 %v2152
    %v2594 = vpop.f32.mrb[0].mxu0
    %v2595 = vadd.f32 %v2555, %v2594
    %v2596 = vpop.f32.mrb[0].mxu0
    %v2597 = vpop.f32.mrb[0].mxu0
    %v2598 = vpop.f32.mrb[0].mxu0
    %2599 = vdwg.mxu0
    %v2600 = vmax.f32 %v2595, 0.0
    %v2601 = vpack.c.bf16 %v2600, %v2600
    %v2602 = vld [vmem:[%s5] sm:$0xf]
    %v2603 = vld [vmem:[%s5 + $0x4] sm:$0xf]
    %v2604 = vld [vmem:[%s5 + $0x8] sm:$0xf]
    %v2605 = vld [vmem:[%s5 + $0xc] sm:$0xf]
    %v2606 = vld [vmem:[%s5 + $0x10] sm:$0xf]
    %v2607 = vld [vmem:[%s5 + $0x14] sm:$0xf]
    %v2608 = vld [vmem:[%s5 + $0x18] sm:$0xf]
    %v2609 = vld [vmem:[%s5 + $0x1c] sm:$0xf]
    %v2610 = vld [vmem:[%s5 + $0x20] sm:$0xf]
    %v2611 = vld [vmem:[%s5 + $0x24] sm:$0xf]
    %v2612 = vld [vmem:[%s5 + $0x28] sm:$0xf]
    %v2613 = vld [vmem:[%s5 + $0x2c] sm:$0xf]
    %v2614 = vld [vmem:[%s5 + $0x30] sm:$0xf]
    %v2615 = vld [vmem:[%s5 + $0x34] sm:$0xf]
    %v2616 = vld [vmem:[%s5 + $0x38] sm:$0xf]
    %v2617 = vld [vmem:[%s5 + $0x3c] sm:$0xf]
    %v2618 = vld [vmem:[%s6] sm:$0x1]
    %v2620 = vlaneseq
    %v2621 = vshrl.u32 %v2620, 7
    %v2622 = vsub.s32 0, %v2621
    %v2623 = vrot.slane %v2618, %v2622
    %v2641 = vunpack.c.l.b16 %v2602
    %v2642 = vunpack.c.l.b16 %v2603
    %v2643 = vunpack.c.l.b16 %v2604
    %v2644 = vunpack.c.l.b16 %v2605
    %v2645 = vunpack.c.l.b16 %v2606
    %v2646 = vunpack.c.l.b16 %v2607
    %v2647 = vunpack.c.l.b16 %v2608
    %v2648 = vunpack.c.l.b16 %v2609
    %v2649 = vunpack.c.l.b16 %v2610
    %v2650 = vunpack.c.l.b16 %v2611
    %v2651 = vunpack.c.l.b16 %v2612
    %v2652 = vunpack.c.l.b16 %v2613
    %v2653 = vunpack.c.l.b16 %v2614
    %v2654 = vunpack.c.l.b16 %v2615
    %v2655 = vunpack.c.l.b16 %v2616
    %v2656 = vunpack.c.l.b16 %v2617
    %v2657 = vpack.c.b16 %v2642, %v2641
    %v2658 = vpack.c.b16 %v2644, %v2643
    %v2659 = vpack.c.b16 %v2646, %v2645
    %v2660 = vpack.c.b16 %v2648, %v2647
    %v2661 = vpack.c.b16 %v2650, %v2649
    %v2662 = vpack.c.b16 %v2652, %v2651
    %v2663 = vpack.c.b16 %v2654, %v2653
    %v2664 = vpack.c.b16 %v2656, %v2655
    %2673 = vmatprep.subr.bf16.mxu0 0
    %2674 = vmatpush1.bf16.msra.mxu0 %v2657
    %2675 = vmatprep.subr.bf16.mxu0 0
    %2676 = vmatpush1.bf16.msra.mxu0 %v2658
    %2677 = vmatprep.subr.bf16.mxu0 0
    %2678 = vmatpush1.bf16.msra.mxu0 %v2659
    %2679 = vmatprep.subr.bf16.mxu0 0
    %2680 = vmatpush1.bf16.msra.mxu0 %v2660
    %2681 = vmatprep.subr.bf16.mxu0 0
    %2682 = vmatpush1.bf16.msra.mxu0 %v2661
    %2683 = vmatprep.subr.bf16.mxu0 0
    %2684 = vmatpush1.bf16.msra.mxu0 %v2662
    %2685 = vmatprep.subr.bf16.mxu0 0
    %2686 = vmatpush1.bf16.msra.mxu0 %v2663
    %2687 = vmatprep.subr.bf16.mxu0 0
    %2688 = vmatpush1.bf16.msra.mxu0 %v2664
    %2689 = vmatprep.subr.bf16.mxu0 0
    %2690 = vmatpush1.bf16.msra.mxu0 0
    %2691 = vmatprep.subr.bf16.mxu0 0
    %2692 = vmatpush1.bf16.msra.mxu0 0
    %2693 = vmatprep.subr.bf16.mxu0 0
    %2694 = vmatpush1.bf16.msra.mxu0 0
    %2695 = vmatprep.subr.bf16.mxu0 0
    %2696 = vmatpush1.bf16.msra.mxu0 0
    %2697 = vmatprep.subr.bf16.mxu0 0
    %2698 = vmatpush1.bf16.msra.mxu0 0
    %2699 = vmatprep.subr.bf16.mxu0 0
    %2700 = vmatpush1.bf16.msra.mxu0 0
    %2701 = vmatprep.subr.bf16.mxu0 0
    %2702 = vmatpush1.bf16.msra.mxu0 0
    %2703 = vmatprep.subr.bf16.mxu0 0
    %2704 = vmatpush1.bf16.msra.mxu0 0
    %2705 = vmatprep.mubr.bf16.mxu0 0
    %2706 = vmatmul.mubr.bf16.gmra.mrb[0].mxu0 %v2601
    %v2707 = vpop.f32.mrb[0].mxu0
    %v2708 = vadd.f32 %v2623, %v2707
    %v2709 = vpop.f32.mrb[0].mxu0
    %v2710 = vpop.f32.mrb[0].mxu0
    %v2711 = vpop.f32.mrb[0].mxu0
    %2712 = vdwg.mxu0
    %2713 = vst [vmem:[#allocation5] sm:$0xff] %v2708
    // Predicated region
    $region34: #{mymodel_forward.1} parent=1 // pred_check
      _
    $region35: #{mymodel_forward.1} parent=1 // pred_check_branch
      %2715 = sbr.rel (0) target = $region37
    $region36: #{mymodel_forward.1} parent=1 // pred_region
      %s2717 = ssub.s32 128, 128
      %2718 = vsyncadd [#allocation4], %s2717
      %s2720 = sshll.u32 [#allocation5], 4
      %s2721 = int_to_ptr.vmem [resolvable:$true] %s2720
      %2723 = dma.vmem_to_hbm [thread:$0]  %s2721, 128, %s7, [#allocation4]
    $region37: #{mymodel_forward.1} parent=1 // pred_fallthru
      _
    // Predicated region
    $region38: #{mymodel_forward.1} parent=1 // pred_check
      _
    $region39: #{mymodel_forward.1} parent=1 // pred_check_branch
      %2725 = sbr.rel (0) target = $region41
    $region40: #{mymodel_forward.1} parent=1 // pred_region
      %2726 = dma.done [#allocation4], 128
    $region41: #{mymodel_forward.1} parent=1 // pred_fallthru
      _
    %2727 = vsyncpa [#allocation3], 1
    %2728 = vsyncpa [#allocation4], 1

</llo_original>
